<compile_context>
chip_gen: v6e
topology: v6e:2x2x1
jax: 0.10.0
libtpu: 0.0.40
codegen_flags: <defaults>
</compile_context>

<pallas_src>
import jax
import jax.numpy as jnp
from jax import lax
from jax.experimental import pallas as pl
from jax.experimental.pallas import tpu as pltpu

# Small, module-consistent sizes (real model: H=768, MID=512, D=512).
B = 2              # batch
NV = 16            # visual tokens (patches)
NA = 16            # audio tokens
NT = 8             # text tokens
H_BACKBONE = 128   # backbone hidden size (lane-dense stand-in for 768)
MID = 128          # projection1 width (stand-in for 512)
EMB = 128          # embedding_dim (stand-in for 512)
LN_EPS = 1e-5      # torch.nn.LayerNorm default
TEMPERATURE = 1.2  # MultiModalModel temperature (sim = f1n @ f2n^T * T)


# ----------------------------------------------------------------------------
# Single fused kernel: 3 projection heads + all token-similarity matrices.
# ----------------------------------------------------------------------------
def _fused_forward_kernel(vis_ref, aud_ref, txt_ref,           # (B*N, H) inputs
                          w1_ref, b1_ref, w2_ref, b2_ref,      # stacked/folded
                          vis_o, aud_o, txt_o,                  # (B*N, D) feats
                          sim_o):                                # (rows, 128) sims
    sqrt_t = float(TEMPERATURE) ** 0.5
    mid = w1_ref.shape[-1]
    inv_mid = 1.0 / float(mid)

    def project(x_ref, m):
        # Batch pre-flattened into the matmul M dimension: x is (B*N, H).
        x = x_ref[...]
        h = jnp.dot(x, w1_ref[m], preferred_element_type=jnp.float32) + b1_ref[m]
        # One-pass LayerNorm stats; gamma/beta already folded into w2/b2.
        s1 = jnp.sum(h, axis=-1, keepdims=True)
        s2 = jnp.sum(h * h, axis=-1, keepdims=True)
        mu = s1 * inv_mid
        var = s2 * inv_mid - mu * mu
        ln = (h - mu) * lax.rsqrt(var + LN_EPS)
        feats = jnp.dot(ln, w2_ref[m], preferred_element_type=jnp.float32) + b2_ref[m]
        # F.normalize(dim=-1): 1/max(||f||,1e-12) == rsqrt(max(sum f^2, 1e-24)).
        # sqrt(T) folded so every pairwise dot product carries the temperature.
        ssq = jnp.sum(feats * feats, axis=-1, keepdims=True)
        inv = lax.rsqrt(jnp.maximum(ssq, 1e-24)) * sqrt_t
        return feats, feats * inv

    vis_f, vis_n = project(vis_ref, 0)
    aud_f, aud_n = project(aud_ref, 1)
    txt_f, txt_n = project(txt_ref, 2)

    # Raw (un-normalized) projections are the returned *_feats, as in PyTorch.
    vis_o[...] = vis_f
    aud_o[...] = aud_f
    txt_o[...] = txt_f

    # One cross-batch similarity matmul:
    #   lhs = [text; audio]           (B*NT + B*NA, D)
    #   rhs = [vis; audio; zero-pad]  (128-padded rows, D)
    # contracting on the last dims (no explicit .T / XLU relayout).
    # Rows of the result: text block then audio block; columns: vis block,
    # audio block, then zero padding so the single output store is lane-dense.
    n_vis = vis_n.shape[0]
    n_aud = aud_n.shape[0]
    d = vis_n.shape[1]
    pad_rows = sim_o.shape[1] - (n_vis + n_aud)
    rhs_parts = [vis_n, aud_n]
    if pad_rows > 0:
        rhs_parts.append(jnp.zeros((pad_rows, d), jnp.float32))
    rhs = jnp.concatenate(rhs_parts, axis=0)
    lhs = jnp.concatenate([txt_n, aud_n], axis=0)
    sim_o[...] = lax.dot_general(
        lhs, rhs, dimension_numbers=(((1,), (1,)), ((), ())),
        preferred_element_type=jnp.float32)


def multimodal_forward(visual_hidden, audio_hidden, text_hidden, params):
    """Fused forward for all three modalities.

    visual_hidden: (B, NV, H), audio_hidden: (B, NA, H), text_hidden: (B, NT, H)
    params: raw head params (w1, b1, gamma, beta, w2, b2), each stacked along a
            leading modality axis ordered [visual, audio, text].
    """
    w1_all, b1_all, gamma_all, beta_all, w2_all, b2_all = params
    Bx, Nv, H = visual_hidden.shape
    _, Na, _ = audio_hidden.shape
    _, Nt, _ = text_hidden.shape
    D = w2_all.shape[-1]

    # Fold LayerNorm affine params into projection2 (exact algebraic identity):
    #   LN(h)*gamma + beta) @ w2 + b2 == LN(h) @ (gamma[:,None]*w2) + (beta@w2 + b2)
    w2f_all = gamma_all[:, :, None] * w2_all                       # (3, MID, D)
    b2f_all = (jnp.einsum("hm,hmd->hd", beta_all, w2_all)
               + b2_all[:, 0])[:, None, :]                         # (3, 1, D)

    # Flatten batch into the matmul M dimension (free metadata reshape in HBM).
    vis2d = visual_hidden.reshape(Bx * Nv, H)
    aud2d = audio_hidden.reshape(Bx * Na, H)
    txt2d = text_hidden.reshape(Bx * Nt, H)

    sim_rows = Bx * Nt + Bx * Na
    sim_cols = Bx * Nv + Bx * Na
    sim_cols_pad = max(128, ((sim_cols + 127) // 128) * 128)       # lane-dense slab

    vmem = pl.BlockSpec(memory_space=pltpu.MemorySpace.VMEM)

    outs = pl.pallas_call(
        _fused_forward_kernel,
        out_shape=(
            jax.ShapeDtypeStruct((Bx * Nv, D), jnp.float32),
            jax.ShapeDtypeStruct((Bx * Na, D), jnp.float32),
            jax.ShapeDtypeStruct((Bx * Nt, D), jnp.float32),
            jax.ShapeDtypeStruct((sim_rows, sim_cols_pad), jnp.float32),
        ),
        in_specs=[vmem] * 7,
        out_specs=(vmem, vmem, vmem, vmem),
    )(vis2d, aud2d, txt2d, w1_all, b1_all, w2f_all, b2f_all)

    vis_f, aud_f, txt_f, sims = outs

    # Extract per-batch (same-batch) similarity blocks from the cross-batch slab.
    nt, na, nv = Bx * Nt, Bx * Na, Bx * Nv
    idx = jnp.arange(Bx)
    tv = sims[:nt, :nv].reshape(Bx, Nt, Bx, Nv)[idx, :, idx, :]          # (B,NT,NV)
    ta = sims[:nt, nv:nv + na].reshape(Bx, Nt, Bx, Na)[idx, :, idx, :]   # (B,NT,NA)
    av = sims[nt:nt + na, :nv].reshape(Bx, Na, Bx, Nv)[idx, :, idx, :]   # (B,NA,NV)

    return {
        "visual_feats": vis_f.reshape(Bx, Nv, D),
        "audio_feats": aud_f.reshape(Bx, Na, D),
        "text_feats": txt_f.reshape(Bx, Nt, D),
        "vis_text_sim_matrix": tv,
        "vis_audio_sim_matrix": av,
        "text_audio_sim_matrix": ta,
    }


# ----------------------------------------------------------------------------
# Parameter init (deterministic, PyTorch nn.Linear-style uniform), stacked
# along a leading modality axis: [visual, audio, text].
# gamma/beta are perturbed away from the torch init (ones/zeros) so the
# host-side gamma/beta -> w2/b2 fold is actually exercised by the check.
# ----------------------------------------------------------------------------
def init_params(key, h_in, mid, d_out, num_heads=3):
    keys = jax.random.split(key, 6 * num_heads)
    lim1 = 1.0 / (h_in ** 0.5)
    lim2 = 1.0 / (mid ** 0.5)
    w1s, b1s, gs, bs, w2s, b2s = [], [], [], [], [], []
    for h in range(num_heads):
        k1, k2, k3, k4, k5, k6 = keys[6 * h:6 * h + 6]
        w1s.append(jax.random.uniform(k1, (h_in, mid), jnp.float32, -lim1, lim1))
        b1s.append(jax.random.uniform(k2, (1, mid), jnp.float32, -lim1, lim1))
        gs.append(1.0 + 0.1 * jax.random.normal(k3, (mid,), jnp.float32))
        bs.append(0.1 * jax.random.normal(k4, (mid,), jnp.float32))
        w2s.append(jax.random.uniform(k5, (mid, d_out), jnp.float32, -lim2, lim2))
        b2s.append(jax.random.uniform(k6, (1, d_out), jnp.float32, -lim2, lim2))
    return (jnp.stack(w1s), jnp.stack(b1s), jnp.stack(gs), jnp.stack(bs),
            jnp.stack(w2s), jnp.stack(b2s))


# ----------------------------------------------------------------------------
# Pure-JAX reference (sanity check of the fused Pallas kernel).
# ----------------------------------------------------------------------------
def ref_forward(visual_hidden, audio_hidden, text_hidden, params, temperature):
    w1_all, b1_all, gamma_all, beta_all, w2_all, b2_all = params

    def head(x, m):
        h = x @ w1_all[m] + b1_all[m, 0]
        mu = h.mean(-1, keepdims=True)
        var = ((h - mu) ** 2).mean(-1, keepdims=True)
        ln = (h - mu) / jnp.sqrt(var + LN_EPS) * gamma_all[m] + beta_all[m]
        return ln @ w2_all[m] + b2_all[m, 0]

    def sim(f1, f2):
        f1n = f1 / jnp.maximum(jnp.linalg.norm(f1, axis=-1, keepdims=True), 1e-12)
        f2n = f2 / jnp.maximum(jnp.linalg.norm(f2, axis=-1, keepdims=True), 1e-12)
        return jnp.einsum("bnd,bmd->bnm", f1n, f2n) * temperature

    vf = head(visual_hidden, 0)
    af = head(audio_hidden, 1)
    tf_ = head(text_hidden, 2)
    return {
        "visual_feats": vf,
        "audio_feats": af,
        "text_feats": tf_,
        "vis_text_sim_matrix": sim(tf_, vf),
        "vis_audio_sim_matrix": sim(af, vf),
        "text_audio_sim_matrix": sim(tf_, af),
    }


if __name__ == "__main__":
    root = jax.random.PRNGKey(0)
    k_vis, k_aud, k_txt, k_par = jax.random.split(root, 4)

    # Synthetic backbone hidden states (stand-ins for DINOv2 / HuBERT / BERT).
    # TODO(synk): pretrained HuBERT / ModernBERT / DINOv2+LoRA backbones, the
    # HF tokenizer/processor and PIL image loading are not translatable; the
    # kernel starts from their hidden states.
    visual_hidden = jax.random.normal(k_vis, (B, NV, H_BACKBONE), jnp.float32)
    audio_hidden = jax.random.normal(k_aud, (B, NA, H_BACKBONE), jnp.float32)
    text_hidden = jax.random.normal(k_txt, (B, NT, H_BACKBONE), jnp.float32)

    params = init_params(k_par, H_BACKBONE, MID, EMB)

    out = multimodal_forward(visual_hidden, audio_hidden, text_hidden, params)
    out = jax.tree_util.tree_map(jax.block_until_ready, out)

    refs = ref_forward(visual_hidden, audio_hidden, text_hidden, params,
                       TEMPERATURE)
    for name, r in refs.items():
        assert out[name].shape == r.shape, (name, out[name].shape, r.shape)
        err = float(jnp.max(jnp.abs(out[name] - r)))
        assert err < 2e-3, f"{name}: max abs err {err}"

    print("KERNEL_OK")
</pallas_src>

<mosaic_0001>
module attributes {stable_mosaic.version = 11 : i64} {
  func.func @_fused_forward_kernel(%arg0: memref<32x128xf32, #tpu.memory_space<vmem>>, %arg1: memref<32x128xf32, #tpu.memory_space<vmem>>, %arg2: memref<16x128xf32, #tpu.memory_space<vmem>>, %arg3: memref<3x128x128xf32, #tpu.memory_space<vmem>>, %arg4: memref<3x1x128xf32, #tpu.memory_space<vmem>>, %arg5: memref<3x128x128xf32, #tpu.memory_space<vmem>>, %arg6: memref<3x1x128xf32, #tpu.memory_space<vmem>>, %arg7: memref<32x128xf32, #tpu.memory_space<vmem>>, %arg8: memref<32x128xf32, #tpu.memory_space<vmem>>, %arg9: memref<16x128xf32, #tpu.memory_space<vmem>>, %arg10: memref<48x128xf32, #tpu.memory_space<vmem>>) attributes {dimension_semantics = [], scalar_prefetch = 0 : i64, scratch_operands = 0 : i64, tpu.core_type = #tpu.core_type<tc>} {
    %c0 = arith.constant 0 : index
    %c0_0 = arith.constant 0 : index
    %0 = vector.load %arg0[%c0, %c0_0] : memref<32x128xf32, #tpu.memory_space<vmem>>, vector<32x128xf32>
    %c0_1 = arith.constant 0 : index
    %c0_2 = arith.constant 0 : index
    %c0_3 = arith.constant 0 : index
    %1 = vector.load %arg3[%c0_1, %c0_2, %c0_3] : memref<3x128x128xf32, #tpu.memory_space<vmem>>, vector<1x128x128xf32>
    %2 = vector.shape_cast %1 : vector<1x128x128xf32> to vector<128x128xf32>
    %cst = arith.constant dense<0.000000e+00> : vector<32x128xf32>
    %3 = tpu.matmul %0, %2, %cst {dimension_numbers = #tpu.dot_dimension_numbers<[1], [0], [0], [1], [0, 0, 1, 1], [], []>} : vector<32x128xf32>, vector<128x128xf32>, vector<32x128xf32> -> vector<32x128xf32>
    %c0_4 = arith.constant 0 : index
    %c0_5 = arith.constant 0 : index
    %c0_6 = arith.constant 0 : index
    %4 = vector.load %arg4[%c0_4, %c0_5, %c0_6] : memref<3x1x128xf32, #tpu.memory_space<vmem>>, vector<1x1x128xf32>
    %5 = vector.shape_cast %4 : vector<1x1x128xf32> to vector<1x128xf32>
    %6 = vector.broadcast %5 : vector<1x128xf32> to vector<32x128xf32>
    %7 = arith.addf %3, %6 : vector<32x128xf32>
    %cst_7 = arith.constant dense<0.000000e+00> : vector<32xf32>
    %8 = vector.multi_reduction <add>, %7, %cst_7 [1] : vector<32x128xf32> to vector<32xf32>
    %9 = vector.shape_cast %8 : vector<32xf32> to vector<32x1xf32>
    %10 = arith.mulf %7, %7 : vector<32x128xf32>
    %cst_8 = arith.constant dense<0.000000e+00> : vector<32xf32>
    %11 = vector.multi_reduction <add>, %10, %cst_8 [1] : vector<32x128xf32> to vector<32xf32>
    %12 = vector.shape_cast %11 : vector<32xf32> to vector<32x1xf32>
    %cst_9 = arith.constant 7.812500e-03 : f32
    %13 = vector.broadcast %cst_9 : f32 to vector<32x1xf32>
    %14 = arith.mulf %9, %13 : vector<32x1xf32>
    %cst_10 = arith.constant 7.812500e-03 : f32
    %15 = vector.broadcast %cst_10 : f32 to vector<32x1xf32>
    %16 = arith.mulf %12, %15 : vector<32x1xf32>
    %17 = arith.mulf %14, %14 : vector<32x1xf32>
    %18 = arith.subf %16, %17 : vector<32x1xf32>
    %19 = vector.broadcast %14 : vector<32x1xf32> to vector<32x128xf32>
    %20 = arith.subf %7, %19 : vector<32x128xf32>
    %cst_11 = arith.constant 9.99999974E-6 : f32
    %21 = vector.broadcast %cst_11 : f32 to vector<32x1xf32>
    %22 = arith.addf %18, %21 : vector<32x1xf32>
    %23 = math.rsqrt %22 : vector<32x1xf32>
    %24 = vector.broadcast %23 : vector<32x1xf32> to vector<32x128xf32>
    %25 = arith.mulf %20, %24 : vector<32x128xf32>
    %c0_12 = arith.constant 0 : index
    %c0_13 = arith.constant 0 : index
    %c0_14 = arith.constant 0 : index
    %26 = vector.load %arg5[%c0_12, %c0_13, %c0_14] : memref<3x128x128xf32, #tpu.memory_space<vmem>>, vector<1x128x128xf32>
    %27 = vector.shape_cast %26 : vector<1x128x128xf32> to vector<128x128xf32>
    %cst_15 = arith.constant dense<0.000000e+00> : vector<32x128xf32>
    %28 = tpu.matmul %25, %27, %cst_15 {dimension_numbers = #tpu.dot_dimension_numbers<[1], [0], [0], [1], [0, 0, 1, 1], [], []>} : vector<32x128xf32>, vector<128x128xf32>, vector<32x128xf32> -> vector<32x128xf32>
    %c0_16 = arith.constant 0 : index
    %c0_17 = arith.constant 0 : index
    %c0_18 = arith.constant 0 : index
    %29 = vector.load %arg6[%c0_16, %c0_17, %c0_18] : memref<3x1x128xf32, #tpu.memory_space<vmem>>, vector<1x1x128xf32>
    %30 = vector.shape_cast %29 : vector<1x1x128xf32> to vector<1x128xf32>
    %31 = vector.broadcast %30 : vector<1x128xf32> to vector<32x128xf32>
    %32 = arith.addf %28, %31 : vector<32x128xf32>
    %33 = arith.mulf %32, %32 : vector<32x128xf32>
    %cst_19 = arith.constant dense<0.000000e+00> : vector<32xf32>
    %34 = vector.multi_reduction <add>, %33, %cst_19 [1] : vector<32x128xf32> to vector<32xf32>
    %35 = vector.shape_cast %34 : vector<32xf32> to vector<32x1xf32>
    %cst_20 = arith.constant 1.000000e-24 : f32
    %36 = vector.broadcast %cst_20 : f32 to vector<32x1xf32>
    %37 = arith.maximumf %35, %36 : vector<32x1xf32>
    %38 = math.rsqrt %37 : vector<32x1xf32>
    %cst_21 = arith.constant 1.09544516 : f32
    %39 = vector.broadcast %cst_21 : f32 to vector<32x1xf32>
    %40 = arith.mulf %38, %39 : vector<32x1xf32>
    %41 = vector.broadcast %40 : vector<32x1xf32> to vector<32x128xf32>
    %42 = arith.mulf %32, %41 : vector<32x128xf32>
    %c0_22 = arith.constant 0 : index
    %c0_23 = arith.constant 0 : index
    %43 = vector.load %arg1[%c0_22, %c0_23] : memref<32x128xf32, #tpu.memory_space<vmem>>, vector<32x128xf32>
    %c1 = arith.constant 1 : index
    %c0_24 = arith.constant 0 : index
    %c0_25 = arith.constant 0 : index
    %44 = vector.load %arg3[%c1, %c0_24, %c0_25] : memref<3x128x128xf32, #tpu.memory_space<vmem>>, vector<1x128x128xf32>
    %45 = vector.shape_cast %44 : vector<1x128x128xf32> to vector<128x128xf32>
    %cst_26 = arith.constant dense<0.000000e+00> : vector<32x128xf32>
    %46 = tpu.matmul %43, %45, %cst_26 {dimension_numbers = #tpu.dot_dimension_numbers<[1], [0], [0], [1], [0, 0, 1, 1], [], []>} : vector<32x128xf32>, vector<128x128xf32>, vector<32x128xf32> -> vector<32x128xf32>
    %c1_27 = arith.constant 1 : index
    %c0_28 = arith.constant 0 : index
    %c0_29 = arith.constant 0 : index
    %47 = vector.load %arg4[%c1_27, %c0_28, %c0_29] : memref<3x1x128xf32, #tpu.memory_space<vmem>>, vector<1x1x128xf32>
    %48 = vector.shape_cast %47 : vector<1x1x128xf32> to vector<1x128xf32>
    %49 = vector.broadcast %48 : vector<1x128xf32> to vector<32x128xf32>
    %50 = arith.addf %46, %49 : vector<32x128xf32>
    %cst_30 = arith.constant dense<0.000000e+00> : vector<32xf32>
    %51 = vector.multi_reduction <add>, %50, %cst_30 [1] : vector<32x128xf32> to vector<32xf32>
    %52 = vector.shape_cast %51 : vector<32xf32> to vector<32x1xf32>
    %53 = arith.mulf %50, %50 : vector<32x128xf32>
    %cst_31 = arith.constant dense<0.000000e+00> : vector<32xf32>
    %54 = vector.multi_reduction <add>, %53, %cst_31 [1] : vector<32x128xf32> to vector<32xf32>
    %55 = vector.shape_cast %54 : vector<32xf32> to vector<32x1xf32>
    %cst_32 = arith.constant 7.812500e-03 : f32
    %56 = vector.broadcast %cst_32 : f32 to vector<32x1xf32>
    %57 = arith.mulf %52, %56 : vector<32x1xf32>
    %cst_33 = arith.constant 7.812500e-03 : f32
    %58 = vector.broadcast %cst_33 : f32 to vector<32x1xf32>
    %59 = arith.mulf %55, %58 : vector<32x1xf32>
    %60 = arith.mulf %57, %57 : vector<32x1xf32>
    %61 = arith.subf %59, %60 : vector<32x1xf32>
    %62 = vector.broadcast %57 : vector<32x1xf32> to vector<32x128xf32>
    %63 = arith.subf %50, %62 : vector<32x128xf32>
    %cst_34 = arith.constant 9.99999974E-6 : f32
    %64 = vector.broadcast %cst_34 : f32 to vector<32x1xf32>
    %65 = arith.addf %61, %64 : vector<32x1xf32>
    %66 = math.rsqrt %65 : vector<32x1xf32>
    %67 = vector.broadcast %66 : vector<32x1xf32> to vector<32x128xf32>
    %68 = arith.mulf %63, %67 : vector<32x128xf32>
    %c1_35 = arith.constant 1 : index
    %c0_36 = arith.constant 0 : index
    %c0_37 = arith.constant 0 : index
    %69 = vector.load %arg5[%c1_35, %c0_36, %c0_37] : memref<3x128x128xf32, #tpu.memory_space<vmem>>, vector<1x128x128xf32>
    %70 = vector.shape_cast %69 : vector<1x128x128xf32> to vector<128x128xf32>
    %cst_38 = arith.constant dense<0.000000e+00> : vector<32x128xf32>
    %71 = tpu.matmul %68, %70, %cst_38 {dimension_numbers = #tpu.dot_dimension_numbers<[1], [0], [0], [1], [0, 0, 1, 1], [], []>} : vector<32x128xf32>, vector<128x128xf32>, vector<32x128xf32> -> vector<32x128xf32>
    %c1_39 = arith.constant 1 : index
    %c0_40 = arith.constant 0 : index
    %c0_41 = arith.constant 0 : index
    %72 = vector.load %arg6[%c1_39, %c0_40, %c0_41] : memref<3x1x128xf32, #tpu.memory_space<vmem>>, vector<1x1x128xf32>
    %73 = vector.shape_cast %72 : vector<1x1x128xf32> to vector<1x128xf32>
    %74 = vector.broadcast %73 : vector<1x128xf32> to vector<32x128xf32>
    %75 = arith.addf %71, %74 : vector<32x128xf32>
    %76 = arith.mulf %75, %75 : vector<32x128xf32>
    %cst_42 = arith.constant dense<0.000000e+00> : vector<32xf32>
    %77 = vector.multi_reduction <add>, %76, %cst_42 [1] : vector<32x128xf32> to vector<32xf32>
    %78 = vector.shape_cast %77 : vector<32xf32> to vector<32x1xf32>
    %cst_43 = arith.constant 1.000000e-24 : f32
    %79 = vector.broadcast %cst_43 : f32 to vector<32x1xf32>
    %80 = arith.maximumf %78, %79 : vector<32x1xf32>
    %81 = math.rsqrt %80 : vector<32x1xf32>
    %cst_44 = arith.constant 1.09544516 : f32
    %82 = vector.broadcast %cst_44 : f32 to vector<32x1xf32>
    %83 = arith.mulf %81, %82 : vector<32x1xf32>
    %84 = vector.broadcast %83 : vector<32x1xf32> to vector<32x128xf32>
    %85 = arith.mulf %75, %84 : vector<32x128xf32>
    %c0_45 = arith.constant 0 : index
    %c0_46 = arith.constant 0 : index
    %86 = vector.load %arg2[%c0_45, %c0_46] : memref<16x128xf32, #tpu.memory_space<vmem>>, vector<16x128xf32>
    %c2 = arith.constant 2 : index
    %c0_47 = arith.constant 0 : index
    %c0_48 = arith.constant 0 : index
    %87 = vector.load %arg3[%c2, %c0_47, %c0_48] : memref<3x128x128xf32, #tpu.memory_space<vmem>>, vector<1x128x128xf32>
    %88 = vector.shape_cast %87 : vector<1x128x128xf32> to vector<128x128xf32>
    %cst_49 = arith.constant dense<0.000000e+00> : vector<16x128xf32>
    %89 = tpu.matmul %86, %88, %cst_49 {dimension_numbers = #tpu.dot_dimension_numbers<[1], [0], [0], [1], [0, 0, 1, 1], [], []>} : vector<16x128xf32>, vector<128x128xf32>, vector<16x128xf32> -> vector<16x128xf32>
    %c2_50 = arith.constant 2 : index
    %c0_51 = arith.constant 0 : index
    %c0_52 = arith.constant 0 : index
    %90 = vector.load %arg4[%c2_50, %c0_51, %c0_52] : memref<3x1x128xf32, #tpu.memory_space<vmem>>, vector<1x1x128xf32>
    %91 = vector.shape_cast %90 : vector<1x1x128xf32> to vector<1x128xf32>
    %92 = vector.broadcast %91 : vector<1x128xf32> to vector<16x128xf32>
    %93 = arith.addf %89, %92 : vector<16x128xf32>
    %cst_53 = arith.constant dense<0.000000e+00> : vector<16xf32>
    %94 = vector.multi_reduction <add>, %93, %cst_53 [1] : vector<16x128xf32> to vector<16xf32>
    %95 = vector.shape_cast %94 : vector<16xf32> to vector<16x1xf32>
    %96 = arith.mulf %93, %93 : vector<16x128xf32>
    %cst_54 = arith.constant dense<0.000000e+00> : vector<16xf32>
    %97 = vector.multi_reduction <add>, %96, %cst_54 [1] : vector<16x128xf32> to vector<16xf32>
    %98 = vector.shape_cast %97 : vector<16xf32> to vector<16x1xf32>
    %cst_55 = arith.constant 7.812500e-03 : f32
    %99 = vector.broadcast %cst_55 : f32 to vector<16x1xf32>
    %100 = arith.mulf %95, %99 : vector<16x1xf32>
    %cst_56 = arith.constant 7.812500e-03 : f32
    %101 = vector.broadcast %cst_56 : f32 to vector<16x1xf32>
    %102 = arith.mulf %98, %101 : vector<16x1xf32>
    %103 = arith.mulf %100, %100 : vector<16x1xf32>
    %104 = arith.subf %102, %103 : vector<16x1xf32>
    %105 = vector.broadcast %100 : vector<16x1xf32> to vector<16x128xf32>
    %106 = arith.subf %93, %105 : vector<16x128xf32>
    %cst_57 = arith.constant 9.99999974E-6 : f32
    %107 = vector.broadcast %cst_57 : f32 to vector<16x1xf32>
    %108 = arith.addf %104, %107 : vector<16x1xf32>
    %109 = math.rsqrt %108 : vector<16x1xf32>
    %110 = vector.broadcast %109 : vector<16x1xf32> to vector<16x128xf32>
    %111 = arith.mulf %106, %110 : vector<16x128xf32>
    %c2_58 = arith.constant 2 : index
    %c0_59 = arith.constant 0 : index
    %c0_60 = arith.constant 0 : index
    %112 = vector.load %arg5[%c2_58, %c0_59, %c0_60] : memref<3x128x128xf32, #tpu.memory_space<vmem>>, vector<1x128x128xf32>
    %113 = vector.shape_cast %112 : vector<1x128x128xf32> to vector<128x128xf32>
    %cst_61 = arith.constant dense<0.000000e+00> : vector<16x128xf32>
    %114 = tpu.matmul %111, %113, %cst_61 {dimension_numbers = #tpu.dot_dimension_numbers<[1], [0], [0], [1], [0, 0, 1, 1], [], []>} : vector<16x128xf32>, vector<128x128xf32>, vector<16x128xf32> -> vector<16x128xf32>
    %c2_62 = arith.constant 2 : index
    %c0_63 = arith.constant 0 : index
    %c0_64 = arith.constant 0 : index
    %115 = vector.load %arg6[%c2_62, %c0_63, %c0_64] : memref<3x1x128xf32, #tpu.memory_space<vmem>>, vector<1x1x128xf32>
    %116 = vector.shape_cast %115 : vector<1x1x128xf32> to vector<1x128xf32>
    %117 = vector.broadcast %116 : vector<1x128xf32> to vector<16x128xf32>
    %118 = arith.addf %114, %117 : vector<16x128xf32>
    %119 = arith.mulf %118, %118 : vector<16x128xf32>
    %cst_65 = arith.constant dense<0.000000e+00> : vector<16xf32>
    %120 = vector.multi_reduction <add>, %119, %cst_65 [1] : vector<16x128xf32> to vector<16xf32>
    %121 = vector.shape_cast %120 : vector<16xf32> to vector<16x1xf32>
    %cst_66 = arith.constant 1.000000e-24 : f32
    %122 = vector.broadcast %cst_66 : f32 to vector<16x1xf32>
    %123 = arith.maximumf %121, %122 : vector<16x1xf32>
    %124 = math.rsqrt %123 : vector<16x1xf32>
    %cst_67 = arith.constant 1.09544516 : f32
    %125 = vector.broadcast %cst_67 : f32 to vector<16x1xf32>
    %126 = arith.mulf %124, %125 : vector<16x1xf32>
    %127 = vector.broadcast %126 : vector<16x1xf32> to vector<16x128xf32>
    %128 = arith.mulf %118, %127 : vector<16x128xf32>
    %c0_68 = arith.constant 0 : index
    %c0_69 = arith.constant 0 : index
    %129 = vector.load %arg7[%c0_68, %c0_69] : memref<32x128xf32, #tpu.memory_space<vmem>>, vector<32x128xf32>
    tpu.vector_store %arg7[%c0_68, %c0_69], %32 {strides = array<i32>} : memref<32x128xf32, #tpu.memory_space<vmem>>, vector<32x128xf32>,
    %c0_70 = arith.constant 0 : index
    %c0_71 = arith.constant 0 : index
    %130 = vector.load %arg8[%c0_70, %c0_71] : memref<32x128xf32, #tpu.memory_space<vmem>>, vector<32x128xf32>
    tpu.vector_store %arg8[%c0_70, %c0_71], %75 {strides = array<i32>} : memref<32x128xf32, #tpu.memory_space<vmem>>, vector<32x128xf32>,
    %c0_72 = arith.constant 0 : index
    %c0_73 = arith.constant 0 : index
    %131 = vector.load %arg9[%c0_72, %c0_73] : memref<16x128xf32, #tpu.memory_space<vmem>>, vector<16x128xf32>
    tpu.vector_store %arg9[%c0_72, %c0_73], %118 {strides = array<i32>} : memref<16x128xf32, #tpu.memory_space<vmem>>, vector<16x128xf32>,
    %cst_74 = arith.constant 0.000000e+00 : f32
    %132 = vector.broadcast %cst_74 : f32 to vector<64x128xf32>
    %133 = tpu.concatenate %42, %85, %132 in 0 : vector<32x128xf32>, vector<32x128xf32>, vector<64x128xf32> -> vector<128x128xf32>
    %134 = tpu.concatenate %128, %85 in 0 : vector<16x128xf32>, vector<32x128xf32> -> vector<48x128xf32>
    %cst_75 = arith.constant dense<0.000000e+00> : vector<48x128xf32>
    %135 = tpu.matmul %134, %133, %cst_75 {dimension_numbers = #tpu.dot_dimension_numbers<[1], [1], [0], [0], [0, 0, 1, 0], [], []>} : vector<48x128xf32>, vector<128x128xf32>, vector<48x128xf32> -> vector<48x128xf32>
    %c0_76 = arith.constant 0 : index
    %c0_77 = arith.constant 0 : index
    %136 = vector.load %arg10[%c0_76, %c0_77] : memref<48x128xf32, #tpu.memory_space<vmem>>, vector<48x128xf32>
    tpu.vector_store %arg10[%c0_76, %c0_77], %135 {strides = array<i32>} : memref<48x128xf32, #tpu.memory_space<vmem>>, vector<48x128xf32>,
    return
  }
}

</mosaic_0001>

<llo_original>
// kernel: tpu_custom_call.1
$region0: #{tpu_custom_call.1}
  #allocation0 [shape = 'u32[]', space=smem, size = 0x4, offset = 0x4, fixed_abs, tag = 'smem constant byte address 0x4 - core index']
  #allocation1 [shape = 'u32[144,128]{1,0:T(1,128)}', space=vmem, size = 0x12000, scoped, tag = 'internal scratch']
  %s0 = inlined_call_operand.hbm [shape: f32[32,128], index: 0, kind: input, shape index: {}]
  %s1 = inlined_call_operand.hbm [shape: f32[32,128], index: 1, kind: input, shape index: {}]
  %s2 = inlined_call_operand.hbm [shape: f32[16,128], index: 2, kind: input, shape index: {}]
  %s3 = inlined_call_operand.hbm [shape: f32[3,128,128], index: 3, kind: input, shape index: {}]
  %s4 = inlined_call_operand.vmem [shape: f32[3,1,128], index: 4, kind: input, shape index: {}]
  %s5 = inlined_call_operand.hbm [shape: f32[3,128,128], index: 5, kind: input, shape index: {}]
  %s6 = inlined_call_operand.vmem [shape: f32[3,1,128], index: 6, kind: input, shape index: {}]
  %s7 = inlined_call_operand.hbm [shape: f32[32,128], index: 7, kind: output, shape index: {0}]
  %s8 = inlined_call_operand.hbm [shape: f32[32,128], index: 8, kind: output, shape index: {1}]
  %s9 = inlined_call_operand.hbm [shape: f32[16,128], index: 9, kind: output, shape index: {2}]
  %s10 = inlined_call_operand.hbm [shape: f32[48,128], index: 10, kind: output, shape index: {3}]
  %11 = xla_tuple %s7, %s8, %s9, %s10
  %s12 = sld [smem:[#allocation0]]
  $region82: #{tpu_custom_call.1} parent=0
    _
  %s14 = ssub.s32 1, %s12
  %s15 = scalar_select 0, %s14, %s12
  $region1: #{tpu_custom_call.1} parent=0
    #allocation2 [shape = 'u8[16384]{0}', space=vmem, size = 0x4000, scoped, tag = 'input window, operand 0, single buffered']
    #allocation3 [shape = 's32[1]{0}', space=sflag, size = 0x4, scoped, tag = 'scoped memory for tpu_custom_call.1']
    #allocation4 [shape = 's32[1]{0}', space=sflag, size = 0x4, scoped, tag = 'scoped memory for tpu_custom_call.1']
    #allocation5 [shape = 'u8[16384]{0}', space=vmem, size = 0x4000, scoped, tag = 'input window, operand 1, single buffered']
    #allocation6 [shape = 's32[1]{0}', space=sflag, size = 0x4, scoped, tag = 'scoped memory for tpu_custom_call.1']
    #allocation7 [shape = 'u8[8192]{0}', space=vmem, size = 0x2000, scoped, tag = 'input window, operand 2, single buffered']
    #allocation8 [shape = 'u8[196608]{0}', space=vmem, size = 0x30000, scoped, tag = 'input window, operand 3, single buffered']
    #allocation9 [shape = 's32[1]{0}', space=sflag, size = 0x4, scoped, tag = 'scoped memory for tpu_custom_call.1']
    #allocation10 [shape = 'u8[196608]{0}', space=vmem, size = 0x30000, scoped, tag = 'input window, operand 5, single buffered']
    #allocation11 [shape = 'u8[16384]{0}', space=vmem, size = 0x4000, scoped, tag = 'output window, operand 0, single buffered']
    #allocation12 [shape = 'u8[16384]{0}', space=vmem, size = 0x4000, scoped, tag = 'output window, operand 1, single buffered']
    #allocation13 [shape = 's32[1]{0}', space=sflag, size = 0x4, scoped, tag = 'scoped memory for tpu_custom_call.1']
    #allocation14 [shape = 'u8[8192]{0}', space=vmem, size = 0x2000, scoped, tag = 'output window, operand 2, single buffered']
    #allocation15 [shape = 'u8[24576]{0}', space=vmem, size = 0x6000, scoped, tag = 'output window, operand 3, single buffered']
    #allocation16 [shape = 's32[1]{0}', space=sflag, size = 0x4, scoped, tag = 'scoped memory for tpu_custom_call.1']
    %16 = vsyncpa [#allocation3], 0
    %17 = vsyncpa [#allocation6], 0
    %18 = vsyncpa [#allocation9], 0
    %19 = vsyncpa [#allocation4], 0
    %20 = vsyncpa [#allocation13], 0
    %21 = vsyncpa [#allocation16], 0
    // Predicated region
    $region2: #{tpu_custom_call.1} parent=1 // pred_check
      _
    $region3: #{tpu_custom_call.1} parent=1 // pred_check_branch
      %23 = sbr.rel (0) target = $region5
    $region4: #{tpu_custom_call.1} parent=1 // pred_region
      %s25 = ssub.s32 512, 512
      %26 = vsyncadd [#allocation3], %s25
      %s27 = sshll.u32 [#allocation2], 4
      %s28 = int_to_ptr.vmem [resolvable:$true] %s27
      %33 = dma.hbm_to_vmem [thread:$0]  %s0, 512, %s28, [#allocation3], 128, 128, 8
    $region5: #{tpu_custom_call.1} parent=1 // pred_fallthru
      _
    // Predicated region
    $region6: #{tpu_custom_call.1} parent=1 // pred_check
      _
    $region7: #{tpu_custom_call.1} parent=1 // pred_check_branch
      %35 = sbr.rel (0) target = $region9
    $region8: #{tpu_custom_call.1} parent=1 // pred_region
      %s37 = ssub.s32 512, 512
      %38 = vsyncadd [#allocation6], %s37
      %s39 = sshll.u32 [#allocation5], 4
      %s40 = int_to_ptr.vmem [resolvable:$true] %s39
      %45 = dma.hbm_to_vmem [thread:$0]  %s1, 512, %s40, [#allocation6], 128, 128, 8
    $region9: #{tpu_custom_call.1} parent=1 // pred_fallthru
      _
    // Predicated region
    $region10: #{tpu_custom_call.1} parent=1 // pred_check
      _
    $region11: #{tpu_custom_call.1} parent=1 // pred_check_branch
      %47 = sbr.rel (0) target = $region13
    $region12: #{tpu_custom_call.1} parent=1 // pred_region
      %s49 = ssub.s32 256, 256
      %50 = vsyncadd [#allocation6], %s49
      %s51 = sshll.u32 [#allocation7], 4
      %s52 = int_to_ptr.vmem [resolvable:$true] %s51
      %57 = dma.hbm_to_vmem [thread:$0]  %s2, 256, %s52, [#allocation6], 128, 128, 8
    $region13: #{tpu_custom_call.1} parent=1 // pred_fallthru
      _
    // Predicated region
    $region14: #{tpu_custom_call.1} parent=1 // pred_check
      _
    $region15: #{tpu_custom_call.1} parent=1 // pred_check_branch
      %59 = sbr.rel (0) target = $region17
    $region16: #{tpu_custom_call.1} parent=1 // pred_region
      %s61 = ssub.s32 6144, 6144
      %62 = vsyncadd [#allocation9], %s61
      %s63 = sshll.u32 [#allocation8], 4
      %s64 = int_to_ptr.vmem [resolvable:$true] %s63
      %69 = dma.hbm_to_vmem [thread:$0]  %s3, 6144, %s64, [#allocation9], 128, 128, 8
    $region17: #{tpu_custom_call.1} parent=1 // pred_fallthru
      _
    // Predicated region
    $region18: #{tpu_custom_call.1} parent=1 // pred_check
      _
    $region19: #{tpu_custom_call.1} parent=1 // pred_check_branch
      %71 = sbr.rel (0) target = $region21
    $region20: #{tpu_custom_call.1} parent=1 // pred_region
      _
    $region21: #{tpu_custom_call.1} parent=1 // pred_fallthru
      _
    // Predicated region
    $region22: #{tpu_custom_call.1} parent=1 // pred_check
      _
    $region23: #{tpu_custom_call.1} parent=1 // pred_check_branch
      %73 = sbr.rel (0) target = $region25
    $region24: #{tpu_custom_call.1} parent=1 // pred_region
      %s75 = ssub.s32 6144, 6144
      %76 = vsyncadd [#allocation9], %s75
      %s77 = sshll.u32 [#allocation10], 4
      %s78 = int_to_ptr.vmem [resolvable:$true] %s77
      %83 = dma.hbm_to_vmem [thread:$0]  %s5, 6144, %s78, [#allocation9], 128, 128, 8
    $region25: #{tpu_custom_call.1} parent=1 // pred_fallthru
      _
    // Predicated region
    $region26: #{tpu_custom_call.1} parent=1 // pred_check
      _
    $region27: #{tpu_custom_call.1} parent=1 // pred_check_branch
      %85 = sbr.rel (0) target = $region29
    $region28: #{tpu_custom_call.1} parent=1 // pred_region
      _
    $region29: #{tpu_custom_call.1} parent=1 // pred_fallthru
      _
    // Predicated region
    $region30: #{tpu_custom_call.1} parent=1 // pred_check
      _
    $region31: #{tpu_custom_call.1} parent=1 // pred_check_branch
      %87 = sbr.rel (0) target = $region33
    $region32: #{tpu_custom_call.1} parent=1 // pred_region
      %88 = dma.done [#allocation3], 512
    $region33: #{tpu_custom_call.1} parent=1 // pred_fallthru
      _
    // Predicated region
    $region34: #{tpu_custom_call.1} parent=1 // pred_check
      _
    $region35: #{tpu_custom_call.1} parent=1 // pred_check_branch
      %90 = sbr.rel (0) target = $region37
    $region36: #{tpu_custom_call.1} parent=1 // pred_region
      %91 = dma.done [#allocation6], 512
    $region37: #{tpu_custom_call.1} parent=1 // pred_fallthru
      _
    // Predicated region
    $region38: #{tpu_custom_call.1} parent=1 // pred_check
      _
    $region39: #{tpu_custom_call.1} parent=1 // pred_check_branch
      %93 = sbr.rel (0) target = $region41
    $region40: #{tpu_custom_call.1} parent=1 // pred_region
      %94 = dma.done [#allocation6], 256
    $region41: #{tpu_custom_call.1} parent=1 // pred_fallthru
      _
    // Predicated region
    $region42: #{tpu_custom_call.1} parent=1 // pred_check
      _
    $region43: #{tpu_custom_call.1} parent=1 // pred_check_branch
      %96 = sbr.rel (0) target = $region45
    $region44: #{tpu_custom_call.1} parent=1 // pred_region
      %97 = dma.done [#allocation9], 6144
    $region45: #{tpu_custom_call.1} parent=1 // pred_fallthru
      _
    // Predicated region
    $region46: #{tpu_custom_call.1} parent=1 // pred_check
      _
    $region47: #{tpu_custom_call.1} parent=1 // pred_check_branch
      %99 = sbr.rel (0) target = $region49
    $region48: #{tpu_custom_call.1} parent=1 // pred_region
      %100 = dma.done [#allocation9], 6144
    $region49: #{tpu_custom_call.1} parent=1 // pred_fallthru
      _
    %v101 = vld [vmem:[#allocation2] sm:$0xff]
    %v102 = vld [vmem:[#allocation2 + $0x8] sm:$0xff]
    %v103 = vld [vmem:[#allocation2 + $0x10] sm:$0xff]
    %v104 = vld [vmem:[#allocation2 + $0x18] sm:$0xff]
    %v105 = vld [vmem:[#allocation8] sm:$0xff]
    %v106 = vld [vmem:[#allocation8 + $0x8] sm:$0xff]
    %v107 = vld [vmem:[#allocation8 + $0x10] sm:$0xff]
    %v108 = vld [vmem:[#allocation8 + $0x18] sm:$0xff]
    %v109 = vld [vmem:[#allocation8 + $0x20] sm:$0xff]
    %v110 = vld [vmem:[#allocation8 + $0x28] sm:$0xff]
    %v111 = vld [vmem:[#allocation8 + $0x30] sm:$0xff]
    %v112 = vld [vmem:[#allocation8 + $0x38] sm:$0xff]
    %v113 = vld [vmem:[#allocation8 + $0x40] sm:$0xff]
    %v114 = vld [vmem:[#allocation8 + $0x48] sm:$0xff]
    %v115 = vld [vmem:[#allocation8 + $0x50] sm:$0xff]
    %v116 = vld [vmem:[#allocation8 + $0x58] sm:$0xff]
    %v117 = vld [vmem:[#allocation8 + $0x60] sm:$0xff]
    %v118 = vld [vmem:[#allocation8 + $0x68] sm:$0xff]
    %v119 = vld [vmem:[#allocation8 + $0x70] sm:$0xff]
    %v120 = vld [vmem:[#allocation8 + $0x78] sm:$0xff]
    %v121 = vld [vmem:[%s4] sm:$0x1]
    %v123 = vlaneseq
    %v124 = vshrl.u32 %v123, 7
    %v125 = vsub.s32 0, %v124
    %v126 = vrot.slane %v121, %v125
    %128 = vmatprep.subr.mxu0 0.0
    %129 = vmatpush1.msra.mxu0 %v120
    %130 = vmatprep.subr.mxu0 0.0
    %131 = vmatpush1.msra.mxu0 %v119
    %132 = vmatprep.subr.mxu0 0.0
    %133 = vmatpush1.msra.mxu0 %v118
    %134 = vmatprep.subr.mxu0 0.0
    %135 = vmatpush1.msra.mxu0 %v117
    %136 = vmatprep.subr.mxu0 0.0
    %137 = vmatpush1.msra.mxu0 %v116
    %138 = vmatprep.subr.mxu0 0.0
    %139 = vmatpush1.msra.mxu0 %v115
    %140 = vmatprep.subr.mxu0 0.0
    %141 = vmatpush1.msra.mxu0 %v114
    %142 = vmatprep.subr.mxu0 0.0
    %143 = vmatpush1.msra.mxu0 %v113
    %144 = vmatprep.subr.mxu0 0.0
    %145 = vmatpush1.msra.mxu0 %v112
    %146 = vmatprep.subr.mxu0 0.0
    %147 = vmatpush1.msra.mxu0 %v111
    %148 = vmatprep.subr.mxu0 0.0
    %149 = vmatpush1.msra.mxu0 %v110
    %150 = vmatprep.subr.mxu0 0.0
    %151 = vmatpush1.msra.mxu0 %v109
    %152 = vmatprep.subr.mxu0 0.0
    %153 = vmatpush1.msra.mxu0 %v108
    %154 = vmatprep.subr.mxu0 0.0
    %155 = vmatpush1.msra.mxu0 %v107
    %156 = vmatprep.subr.mxu0 0.0
    %157 = vmatpush1.msra.mxu0 %v106
    %158 = vmatprep.subr.mxu0 0.0
    %159 = vmatpush1.msra.mxu0 %v105
    %160 = vmatprep.subr.mxu0 0.0
    %161 = vmatpush2.msra.mxu0 0.0
    %162 = vmatprep.subr.mxu0 0.0
    %163 = vmatpush2.msra.mxu0 0.0
    %164 = vmatprep.subr.mxu0 0.0
    %165 = vmatpush2.msra.mxu0 0.0
    %166 = vmatprep.subr.mxu0 0.0
    %167 = vmatpush2.msra.mxu0 0.0
    %168 = vmatprep.subr.mxu0 0.0
    %169 = vmatpush2.msra.mxu0 0.0
    %170 = vmatprep.subr.mxu0 0.0
    %171 = vmatpush2.msra.mxu0 0.0
    %172 = vmatprep.subr.mxu0 0.0
    %173 = vmatpush2.msra.mxu0 0.0
    %174 = vmatprep.subr.mxu0 0.0
    %175 = vmatpush2.msra.mxu0 0.0
    %176 = vmatprep.subr.mxu0 0.0
    %177 = vmatpush2.msra.mxu0 0.0
    %178 = vmatprep.subr.mxu0 0.0
    %179 = vmatpush2.msra.mxu0 0.0
    %180 = vmatprep.subr.mxu0 0.0
    %181 = vmatpush2.msra.mxu0 0.0
    %182 = vmatprep.subr.mxu0 0.0
    %183 = vmatpush2.msra.mxu0 0.0
    %184 = vmatprep.subr.mxu0 0.0
    %185 = vmatpush2.msra.mxu0 0.0
    %186 = vmatprep.subr.mxu0 0.0
    %187 = vmatpush2.msra.mxu0 0.0
    %188 = vmatprep.subr.mxu0 0.0
    %189 = vmatpush2.msra.mxu0 0.0
    %190 = vmatprep.subr.mxu0 0.0
    %191 = vmatpush2.msra.mxu0 0.0
    %192 = vmatprep.mubr.f32.mxu0 0.0
    %193 = vmatmul.mubr.f32.gmra.mxu0 %v101
    %v194 = vpop.f32.mrf.mxu0
    %v195 = vadd.f32 %v126, %v194
    %v196 = vpop.f32.mrf.mxu0
    %197 = vmatprep.mubr.f32.mxu0 0.0
    %198 = vmatmul.mubr.f32.gmra.mxu0 %v102
    %v199 = vpop.f32.mrf.mxu0
    %v200 = vadd.f32 %v126, %v199
    %v201 = vpop.f32.mrf.mxu0
    %202 = vmatprep.mubr.f32.mxu0 0.0
    %203 = vmatmul.mubr.f32.gmra.mxu0 %v103
    %v204 = vpop.f32.mrf.mxu0
    %v205 = vadd.f32 %v126, %v204
    %v206 = vpop.f32.mrf.mxu0
    %207 = vmatprep.mubr.f32.mxu0 0.0
    %208 = vmatmul.mubr.f32.gmra.mxu0 %v104
    %v209 = vpop.f32.mrf.mxu0
    %v210 = vadd.f32 %v126, %v209
    %v211 = vpop.f32.mrf.mxu0
    %212 = vdwg.mxu0
    %213 = vadd.xlane.f32.xlu0 %v195
    %v214 = vpop.xlane.xlu0 %213
    %215 = vadd.xlane.f32.xlu0 %v200
    %v216 = vpop.xlane.xlu0 %215
    %217 = vadd.xlane.f32.xlu0 %v205
    %v218 = vpop.xlane.xlu0 %217
    %219 = vadd.xlane.f32.xlu0 %v210
    %v220 = vpop.xlane.xlu0 %219
    %v221 = vmul.f32 %v195, %v195
    %v222 = vmul.f32 %v200, %v200
    %v223 = vmul.f32 %v205, %v205
    %v224 = vmul.f32 %v210, %v210
    %225 = vadd.xlane.f32.xlu0 %v221
    %v226 = vpop.xlane.xlu0 %225
    %227 = vadd.xlane.f32.xlu0 %v222
    %v228 = vpop.xlane.xlu0 %227
    %229 = vadd.xlane.f32.xlu0 %v223
    %v230 = vpop.xlane.xlu0 %229
    %231 = vadd.xlane.f32.xlu0 %v224
    %v232 = vpop.xlane.xlu0 %231
    %v233 = vmul.f32 %v214, 0.0078125
    %v234 = vmul.f32 %v216, 0.0078125
    %v235 = vmul.f32 %v218, 0.0078125
    %v236 = vmul.f32 %v220, 0.0078125
    %v237 = vmul.f32 %v226, 0.0078125
    %v238 = vmul.f32 %v228, 0.0078125
    %v239 = vmul.f32 %v230, 0.0078125
    %v240 = vmul.f32 %v232, 0.0078125
    %v241 = vmul.f32 %v233, %v233
    %v242 = vmul.f32 %v234, %v234
    %v243 = vmul.f32 %v235, %v235
    %v244 = vmul.f32 %v236, %v236
    %v245 = vsub.f32 %v237, %v241
    %v246 = vsub.f32 %v238, %v242
    %v247 = vsub.f32 %v239, %v243
    %v248 = vsub.f32 %v240, %v244
    %v249 = vsub.f32 %v195, %v233
    %v250 = vsub.f32 %v200, %v234
    %v251 = vsub.f32 %v205, %v235
    %v252 = vsub.f32 %v210, %v236
    %v253 = vadd.f32 %v245, 1e-05
    %v254 = vadd.f32 %v246, 1e-05
    %v255 = vadd.f32 %v247, 1e-05
    %v256 = vadd.f32 %v248, 1e-05
    %v257 = vrsqrt.pop %v253
    %v258 = vrsqrt.pop %v254
    %v259 = vrsqrt.pop %v255
    %v260 = vrsqrt.pop %v256
    %v261 = vmul.f32 %v249, %v257
    %v262 = vmul.f32 %v250, %v258
    %v263 = vmul.f32 %v251, %v259
    %v264 = vmul.f32 %v252, %v260
    %v265 = vld [vmem:[#allocation10] sm:$0xff]
    %v266 = vld [vmem:[#allocation10 + $0x8] sm:$0xff]
    %v267 = vld [vmem:[#allocation10 + $0x10] sm:$0xff]
    %v268 = vld [vmem:[#allocation10 + $0x18] sm:$0xff]
    %v269 = vld [vmem:[#allocation10 + $0x20] sm:$0xff]
    %v270 = vld [vmem:[#allocation10 + $0x28] sm:$0xff]
    %v271 = vld [vmem:[#allocation10 + $0x30] sm:$0xff]
    %v272 = vld [vmem:[#allocation10 + $0x38] sm:$0xff]
    %v273 = vld [vmem:[#allocation10 + $0x40] sm:$0xff]
    %v274 = vld [vmem:[#allocation10 + $0x48] sm:$0xff]
    %v275 = vld [vmem:[#allocation10 + $0x50] sm:$0xff]
    %v276 = vld [vmem:[#allocation10 + $0x58] sm:$0xff]
    %v277 = vld [vmem:[#allocation10 + $0x60] sm:$0xff]
    %v278 = vld [vmem:[#allocation10 + $0x68] sm:$0xff]
    %v279 = vld [vmem:[#allocation10 + $0x70] sm:$0xff]
    %v280 = vld [vmem:[#allocation10 + $0x78] sm:$0xff]
    %v281 = vld [vmem:[%s6] sm:$0x1]
    %v283 = vlaneseq
    %v284 = vshrl.u32 %v283, 7
    %v285 = vsub.s32 0, %v284
    %v286 = vrot.slane %v281, %v285
    %288 = vmatprep.subr.mxu0 0.0
    %289 = vmatpush1.msra.mxu0 %v280
    %290 = vmatprep.subr.mxu0 0.0
    %291 = vmatpush1.msra.mxu0 %v279
    %292 = vmatprep.subr.mxu0 0.0
    %293 = vmatpush1.msra.mxu0 %v278
    %294 = vmatprep.subr.mxu0 0.0
    %295 = vmatpush1.msra.mxu0 %v277
    %296 = vmatprep.subr.mxu0 0.0
    %297 = vmatpush1.msra.mxu0 %v276
    %298 = vmatprep.subr.mxu0 0.0
    %299 = vmatpush1.msra.mxu0 %v275
    %300 = vmatprep.subr.mxu0 0.0
    %301 = vmatpush1.msra.mxu0 %v274
    %302 = vmatprep.subr.mxu0 0.0
    %303 = vmatpush1.msra.mxu0 %v273
    %304 = vmatprep.subr.mxu0 0.0
    %305 = vmatpush1.msra.mxu0 %v272
    %306 = vmatprep.subr.mxu0 0.0
    %307 = vmatpush1.msra.mxu0 %v271
    %308 = vmatprep.subr.mxu0 0.0
    %309 = vmatpush1.msra.mxu0 %v270
    %310 = vmatprep.subr.mxu0 0.0
    %311 = vmatpush1.msra.mxu0 %v269
    %312 = vmatprep.subr.mxu0 0.0
    %313 = vmatpush1.msra.mxu0 %v268
    %314 = vmatprep.subr.mxu0 0.0
    %315 = vmatpush1.msra.mxu0 %v267
    %316 = vmatprep.subr.mxu0 0.0
    %317 = vmatpush1.msra.mxu0 %v266
    %318 = vmatprep.subr.mxu0 0.0
    %319 = vmatpush1.msra.mxu0 %v265
    %320 = vmatprep.subr.mxu0 0.0
    %321 = vmatpush2.msra.mxu0 0.0
    %322 = vmatprep.subr.mxu0 0.0
    %323 = vmatpush2.msra.mxu0 0.0
    %324 = vmatprep.subr.mxu0 0.0
    %325 = vmatpush2.msra.mxu0 0.0
    %326 = vmatprep.subr.mxu0 0.0
    %327 = vmatpush2.msra.mxu0 0.0
    %328 = vmatprep.subr.mxu0 0.0
    %329 = vmatpush2.msra.mxu0 0.0
    %330 = vmatprep.subr.mxu0 0.0
    %331 = vmatpush2.msra.mxu0 0.0
    %332 = vmatprep.subr.mxu0 0.0
    %333 = vmatpush2.msra.mxu0 0.0
    %334 = vmatprep.subr.mxu0 0.0
    %335 = vmatpush2.msra.mxu0 0.0
    %336 = vmatprep.subr.mxu0 0.0
    %337 = vmatpush2.msra.mxu0 0.0
    %338 = vmatprep.subr.mxu0 0.0
    %339 = vmatpush2.msra.mxu0 0.0
    %340 = vmatprep.subr.mxu0 0.0
    %341 = vmatpush2.msra.mxu0 0.0
    %342 = vmatprep.subr.mxu0 0.0
    %343 = vmatpush2.msra.mxu0 0.0
    %344 = vmatprep.subr.mxu0 0.0
    %345 = vmatpush2.msra.mxu0 0.0
    %346 = vmatprep.subr.mxu0 0.0
    %347 = vmatpush2.msra.mxu0 0.0
    %348 = vmatprep.subr.mxu0 0.0
    %349 = vmatpush2.msra.mxu0 0.0
    %350 = vmatprep.subr.mxu0 0.0
    %351 = vmatpush2.msra.mxu0 0.0
    %352 = vmatprep.mubr.f32.mxu0 0.0
    %353 = vmatmul.mubr.f32.gmra.mxu0 %v261
    %v354 = vpop.f32.mrf.mxu0
    %v355 = vadd.f32 %v286, %v354
    %v356 = vpop.f32.mrf.mxu0
    %357 = vmatprep.mubr.f32.mxu0 0.0
    %358 = vmatmul.mubr.f32.gmra.mxu0 %v262
    %v359 = vpop.f32.mrf.mxu0
    %v360 = vadd.f32 %v286, %v359
    %v361 = vpop.f32.mrf.mxu0
    %362 = vmatprep.mubr.f32.mxu0 0.0
    %363 = vmatmul.mubr.f32.gmra.mxu0 %v263
    %v364 = vpop.f32.mrf.mxu0
    %v365 = vadd.f32 %v286, %v364
    %v366 = vpop.f32.mrf.mxu0
    %367 = vmatprep.mubr.f32.mxu0 0.0
    %368 = vmatmul.mubr.f32.gmra.mxu0 %v264
    %v369 = vpop.f32.mrf.mxu0
    %v370 = vadd.f32 %v286, %v369
    %v371 = vpop.f32.mrf.mxu0
    %372 = vdwg.mxu0
    %v373 = vmul.f32 %v355, %v355
    %v374 = vmul.f32 %v360, %v360
    %v375 = vmul.f32 %v365, %v365
    %v376 = vmul.f32 %v370, %v370
    %377 = vadd.xlane.f32.xlu0 %v373
    %v378 = vpop.xlane.xlu0 %377
    %379 = vadd.xlane.f32.xlu0 %v374
    %v380 = vpop.xlane.xlu0 %379
    %381 = vadd.xlane.f32.xlu0 %v375
    %v382 = vpop.xlane.xlu0 %381
    %383 = vadd.xlane.f32.xlu0 %v376
    %v384 = vpop.xlane.xlu0 %383
    %v385 = vmax.f32 %v378, 1e-24
    %v386 = vmax.f32 %v380, 1e-24
    %v387 = vmax.f32 %v382, 1e-24
    %v388 = vmax.f32 %v384, 1e-24
    %v389 = vrsqrt.pop %v385
    %v390 = vrsqrt.pop %v386
    %v391 = vrsqrt.pop %v387
    %v392 = vrsqrt.pop %v388
    %v393 = vmul.f32 %v389, 1.0954452
    %v394 = vmul.f32 %v390, 1.0954452
    %v395 = vmul.f32 %v391, 1.0954452
    %v396 = vmul.f32 %v392, 1.0954452
    %v397 = vmul.f32 %v355, %v393
    %v398 = vmul.f32 %v360, %v394
    %v399 = vmul.f32 %v365, %v395
    %v400 = vmul.f32 %v370, %v396
    %v401 = vld [vmem:[#allocation5] sm:$0xff]
    %v402 = vld [vmem:[#allocation5 + $0x8] sm:$0xff]
    %v403 = vld [vmem:[#allocation5 + $0x10] sm:$0xff]
    %v404 = vld [vmem:[#allocation5 + $0x18] sm:$0xff]
    %s405 = scalar_lea.vmem [#allocation8], 128
    %v406 = vld [vmem:[%s405] sm:$0xff]
    %v407 = vld [vmem:[%s405 + $0x8] sm:$0xff]
    %v408 = vld [vmem:[%s405 + $0x10] sm:$0xff]
    %v409 = vld [vmem:[%s405 + $0x18] sm:$0xff]
    %v410 = vld [vmem:[%s405 + $0x20] sm:$0xff]
    %v411 = vld [vmem:[%s405 + $0x28] sm:$0xff]
    %v412 = vld [vmem:[%s405 + $0x30] sm:$0xff]
    %v413 = vld [vmem:[%s405 + $0x38] sm:$0xff]
    %v414 = vld [vmem:[%s405 + $0x40] sm:$0xff]
    %v415 = vld [vmem:[%s405 + $0x48] sm:$0xff]
    %v416 = vld [vmem:[%s405 + $0x50] sm:$0xff]
    %v417 = vld [vmem:[%s405 + $0x58] sm:$0xff]
    %v418 = vld [vmem:[%s405 + $0x60] sm:$0xff]
    %v419 = vld [vmem:[%s405 + $0x68] sm:$0xff]
    %v420 = vld [vmem:[%s405 + $0x70] sm:$0xff]
    %v421 = vld [vmem:[%s405 + $0x78] sm:$0xff]
    %s422 = scalar_lea.vmem %s4, 1
    %v423 = vld [vmem:[%s422] sm:$0x1]
    %v425 = vlaneseq
    %v426 = vshrl.u32 %v425, 7
    %v427 = vsub.s32 0, %v426
    %v428 = vrot.slane %v423, %v427
    %430 = vmatprep.subr.mxu0 0.0
    %431 = vmatpush1.msra.mxu0 %v421
    %432 = vmatprep.subr.mxu0 0.0
    %433 = vmatpush1.msra.mxu0 %v420
    %434 = vmatprep.subr.mxu0 0.0
    %435 = vmatpush1.msra.mxu0 %v419
    %436 = vmatprep.subr.mxu0 0.0
    %437 = vmatpush1.msra.mxu0 %v418
    %438 = vmatprep.subr.mxu0 0.0
    %439 = vmatpush1.msra.mxu0 %v417
    %440 = vmatprep.subr.mxu0 0.0
    %441 = vmatpush1.msra.mxu0 %v416
    %442 = vmatprep.subr.mxu0 0.0
    %443 = vmatpush1.msra.mxu0 %v415
    %444 = vmatprep.subr.mxu0 0.0
    %445 = vmatpush1.msra.mxu0 %v414
    %446 = vmatprep.subr.mxu0 0.0
    %447 = vmatpush1.msra.mxu0 %v413
    %448 = vmatprep.subr.mxu0 0.0
    %449 = vmatpush1.msra.mxu0 %v412
    %450 = vmatprep.subr.mxu0 0.0
    %451 = vmatpush1.msra.mxu0 %v411
    %452 = vmatprep.subr.mxu0 0.0
    %453 = vmatpush1.msra.mxu0 %v410
    %454 = vmatprep.subr.mxu0 0.0
    %455 = vmatpush1.msra.mxu0 %v409
    %456 = vmatprep.subr.mxu0 0.0
    %457 = vmatpush1.msra.mxu0 %v408
    %458 = vmatprep.subr.mxu0 0.0
    %459 = vmatpush1.msra.mxu0 %v407
    %460 = vmatprep.subr.mxu0 0.0
    %461 = vmatpush1.msra.mxu0 %v406
    %462 = vmatprep.subr.mxu0 0.0
    %463 = vmatpush2.msra.mxu0 0.0
    %464 = vmatprep.subr.mxu0 0.0
    %465 = vmatpush2.msra.mxu0 0.0
    %466 = vmatprep.subr.mxu0 0.0
    %467 = vmatpush2.msra.mxu0 0.0
    %468 = vmatprep.subr.mxu0 0.0
    %469 = vmatpush2.msra.mxu0 0.0
    %470 = vmatprep.subr.mxu0 0.0
    %471 = vmatpush2.msra.mxu0 0.0
    %472 = vmatprep.subr.mxu0 0.0
    %473 = vmatpush2.msra.mxu0 0.0
    %474 = vmatprep.subr.mxu0 0.0
    %475 = vmatpush2.msra.mxu0 0.0
    %476 = vmatprep.subr.mxu0 0.0
    %477 = vmatpush2.msra.mxu0 0.0
    %478 = vmatprep.subr.mxu0 0.0
    %479 = vmatpush2.msra.mxu0 0.0
    %480 = vmatprep.subr.mxu0 0.0
    %481 = vmatpush2.msra.mxu0 0.0
    %482 = vmatprep.subr.mxu0 0.0
    %483 = vmatpush2.msra.mxu0 0.0
    %484 = vmatprep.subr.mxu0 0.0
    %485 = vmatpush2.msra.mxu0 0.0
    %486 = vmatprep.subr.mxu0 0.0
    %487 = vmatpush2.msra.mxu0 0.0
    %488 = vmatprep.subr.mxu0 0.0
    %489 = vmatpush2.msra.mxu0 0.0
    %490 = vmatprep.subr.mxu0 0.0
    %491 = vmatpush2.msra.mxu0 0.0
    %492 = vmatprep.subr.mxu0 0.0
    %493 = vmatpush2.msra.mxu0 0.0
    %494 = vmatprep.mubr.f32.mxu0 0.0
    %495 = vmatmul.mubr.f32.gmra.mxu0 %v401
    %v496 = vpop.f32.mrf.mxu0
    %v497 = vadd.f32 %v428, %v496
    %v498 = vpop.f32.mrf.mxu0
    %499 = vmatprep.mubr.f32.mxu0 0.0
    %500 = vmatmul.mubr.f32.gmra.mxu0 %v402
    %v501 = vpop.f32.mrf.mxu0
    %v502 = vadd.f32 %v428, %v501
    %v503 = vpop.f32.mrf.mxu0
    %504 = vmatprep.mubr.f32.mxu0 0.0
    %505 = vmatmul.mubr.f32.gmra.mxu0 %v403
    %v506 = vpop.f32.mrf.mxu0
    %v507 = vadd.f32 %v428, %v506
    %v508 = vpop.f32.mrf.mxu0
    %509 = vmatprep.mubr.f32.mxu0 0.0
    %510 = vmatmul.mubr.f32.gmra.mxu0 %v404
    %v511 = vpop.f32.mrf.mxu0
    %v512 = vadd.f32 %v428, %v511
    %v513 = vpop.f32.mrf.mxu0
    %514 = vdwg.mxu0
    %515 = vadd.xlane.f32.xlu0 %v497
    %v516 = vpop.xlane.xlu0 %515
    %517 = vadd.xlane.f32.xlu0 %v502
    %v518 = vpop.xlane.xlu0 %517
    %519 = vadd.xlane.f32.xlu0 %v507
    %v520 = vpop.xlane.xlu0 %519
    %521 = vadd.xlane.f32.xlu0 %v512
    %v522 = vpop.xlane.xlu0 %521
    %v523 = vmul.f32 %v497, %v497
    %v524 = vmul.f32 %v502, %v502
    %v525 = vmul.f32 %v507, %v507
    %v526 = vmul.f32 %v512, %v512
    %527 = vadd.xlane.f32.xlu0 %v523
    %v528 = vpop.xlane.xlu0 %527
    %529 = vadd.xlane.f32.xlu0 %v524
    %v530 = vpop.xlane.xlu0 %529
    %531 = vadd.xlane.f32.xlu0 %v525
    %v532 = vpop.xlane.xlu0 %531
    %533 = vadd.xlane.f32.xlu0 %v526
    %v534 = vpop.xlane.xlu0 %533
    %v535 = vmul.f32 %v516, 0.0078125
    %v536 = vmul.f32 %v518, 0.0078125
    %v537 = vmul.f32 %v520, 0.0078125
    %v538 = vmul.f32 %v522, 0.0078125
    %v539 = vmul.f32 %v528, 0.0078125
    %v540 = vmul.f32 %v530, 0.0078125
    %v541 = vmul.f32 %v532, 0.0078125
    %v542 = vmul.f32 %v534, 0.0078125
    %v543 = vmul.f32 %v535, %v535
    %v544 = vmul.f32 %v536, %v536
    %v545 = vmul.f32 %v537, %v537
    %v546 = vmul.f32 %v538, %v538
    %v547 = vsub.f32 %v539, %v543
    %v548 = vsub.f32 %v540, %v544
    %v549 = vsub.f32 %v541, %v545
    %v550 = vsub.f32 %v542, %v546
    %v551 = vsub.f32 %v497, %v535
    %v552 = vsub.f32 %v502, %v536
    %v553 = vsub.f32 %v507, %v537
    %v554 = vsub.f32 %v512, %v538
    %v555 = vadd.f32 %v547, 1e-05
    %v556 = vadd.f32 %v548, 1e-05
    %v557 = vadd.f32 %v549, 1e-05
    %v558 = vadd.f32 %v550, 1e-05
    %v559 = vrsqrt.pop %v555
    %v560 = vrsqrt.pop %v556
    %v561 = vrsqrt.pop %v557
    %v562 = vrsqrt.pop %v558
    %v563 = vmul.f32 %v551, %v559
    %v564 = vmul.f32 %v552, %v560
    %v565 = vmul.f32 %v553, %v561
    %v566 = vmul.f32 %v554, %v562
    %s567 = scalar_lea.vmem [#allocation10], 128
    %v568 = vld [vmem:[%s567] sm:$0xff]
    %v569 = vld [vmem:[%s567 + $0x8] sm:$0xff]
    %v570 = vld [vmem:[%s567 + $0x10] sm:$0xff]
    %v571 = vld [vmem:[%s567 + $0x18] sm:$0xff]
    %v572 = vld [vmem:[%s567 + $0x20] sm:$0xff]
    %v573 = vld [vmem:[%s567 + $0x28] sm:$0xff]
    %v574 = vld [vmem:[%s567 + $0x30] sm:$0xff]
    %v575 = vld [vmem:[%s567 + $0x38] sm:$0xff]
    %v576 = vld [vmem:[%s567 + $0x40] sm:$0xff]
    %v577 = vld [vmem:[%s567 + $0x48] sm:$0xff]
    %v578 = vld [vmem:[%s567 + $0x50] sm:$0xff]
    %v579 = vld [vmem:[%s567 + $0x58] sm:$0xff]
    %v580 = vld [vmem:[%s567 + $0x60] sm:$0xff]
    %v581 = vld [vmem:[%s567 + $0x68] sm:$0xff]
    %v582 = vld [vmem:[%s567 + $0x70] sm:$0xff]
    %v583 = vld [vmem:[%s567 + $0x78] sm:$0xff]
    %s584 = scalar_lea.vmem %s6, 1
    %v585 = vld [vmem:[%s584] sm:$0x1]
    %v587 = vlaneseq
    %v588 = vshrl.u32 %v587, 7
    %v589 = vsub.s32 0, %v588
    %v590 = vrot.slane %v585, %v589
    %592 = vmatprep.subr.mxu0 0.0
    %593 = vmatpush1.msra.mxu0 %v583
    %594 = vmatprep.subr.mxu0 0.0
    %595 = vmatpush1.msra.mxu0 %v582
    %596 = vmatprep.subr.mxu0 0.0
    %597 = vmatpush1.msra.mxu0 %v581
    %598 = vmatprep.subr.mxu0 0.0
    %599 = vmatpush1.msra.mxu0 %v580
    %600 = vmatprep.subr.mxu0 0.0
    %601 = vmatpush1.msra.mxu0 %v579
    %602 = vmatprep.subr.mxu0 0.0
    %603 = vmatpush1.msra.mxu0 %v578
    %604 = vmatprep.subr.mxu0 0.0
    %605 = vmatpush1.msra.mxu0 %v577
    %606 = vmatprep.subr.mxu0 0.0
    %607 = vmatpush1.msra.mxu0 %v576
    %608 = vmatprep.subr.mxu0 0.0
    %609 = vmatpush1.msra.mxu0 %v575
    %610 = vmatprep.subr.mxu0 0.0
    %611 = vmatpush1.msra.mxu0 %v574
    %612 = vmatprep.subr.mxu0 0.0
    %613 = vmatpush1.msra.mxu0 %v573
    %614 = vmatprep.subr.mxu0 0.0
    %615 = vmatpush1.msra.mxu0 %v572
    %616 = vmatprep.subr.mxu0 0.0
    %617 = vmatpush1.msra.mxu0 %v571
    %618 = vmatprep.subr.mxu0 0.0
    %619 = vmatpush1.msra.mxu0 %v570
    %620 = vmatprep.subr.mxu0 0.0
    %621 = vmatpush1.msra.mxu0 %v569
    %622 = vmatprep.subr.mxu0 0.0
    %623 = vmatpush1.msra.mxu0 %v568
    %624 = vmatprep.subr.mxu0 0.0
    %625 = vmatpush2.msra.mxu0 0.0
    %626 = vmatprep.subr.mxu0 0.0
    %627 = vmatpush2.msra.mxu0 0.0
    %628 = vmatprep.subr.mxu0 0.0
    %629 = vmatpush2.msra.mxu0 0.0
    %630 = vmatprep.subr.mxu0 0.0
    %631 = vmatpush2.msra.mxu0 0.0
    %632 = vmatprep.subr.mxu0 0.0
    %633 = vmatpush2.msra.mxu0 0.0
    %634 = vmatprep.subr.mxu0 0.0
    %635 = vmatpush2.msra.mxu0 0.0
    %636 = vmatprep.subr.mxu0 0.0
    %637 = vmatpush2.msra.mxu0 0.0
    %638 = vmatprep.subr.mxu0 0.0
    %639 = vmatpush2.msra.mxu0 0.0
    %640 = vmatprep.subr.mxu0 0.0
    %641 = vmatpush2.msra.mxu0 0.0
    %642 = vmatprep.subr.mxu0 0.0
    %643 = vmatpush2.msra.mxu0 0.0
    %644 = vmatprep.subr.mxu0 0.0
    %645 = vmatpush2.msra.mxu0 0.0
    %646 = vmatprep.subr.mxu0 0.0
    %647 = vmatpush2.msra.mxu0 0.0
    %648 = vmatprep.subr.mxu0 0.0
    %649 = vmatpush2.msra.mxu0 0.0
    %650 = vmatprep.subr.mxu0 0.0
    %651 = vmatpush2.msra.mxu0 0.0
    %652 = vmatprep.subr.mxu0 0.0
    %653 = vmatpush2.msra.mxu0 0.0
    %654 = vmatprep.subr.mxu0 0.0
    %655 = vmatpush2.msra.mxu0 0.0
    %656 = vmatprep.mubr.f32.mxu0 0.0
    %657 = vmatmul.mubr.f32.gmra.mxu0 %v563
    %v658 = vpop.f32.mrf.mxu0
    %v659 = vadd.f32 %v590, %v658
    %v660 = vpop.f32.mrf.mxu0
    %661 = vmatprep.mubr.f32.mxu0 0.0
    %662 = vmatmul.mubr.f32.gmra.mxu0 %v564
    %v663 = vpop.f32.mrf.mxu0
    %v664 = vadd.f32 %v590, %v663
    %v665 = vpop.f32.mrf.mxu0
    %666 = vmatprep.mubr.f32.mxu0 0.0
    %667 = vmatmul.mubr.f32.gmra.mxu0 %v565
    %v668 = vpop.f32.mrf.mxu0
    %v669 = vadd.f32 %v590, %v668
    %v670 = vpop.f32.mrf.mxu0
    %671 = vmatprep.mubr.f32.mxu0 0.0
    %672 = vmatmul.mubr.f32.gmra.mxu0 %v566
    %v673 = vpop.f32.mrf.mxu0
    %v674 = vadd.f32 %v590, %v673
    %v675 = vpop.f32.mrf.mxu0
    %676 = vdwg.mxu0
    %v677 = vmul.f32 %v659, %v659
    %v678 = vmul.f32 %v664, %v664
    %v679 = vmul.f32 %v669, %v669
    %v680 = vmul.f32 %v674, %v674
    %681 = vadd.xlane.f32.xlu0 %v677
    %v682 = vpop.xlane.xlu0 %681
    %683 = vadd.xlane.f32.xlu0 %v678
    %v684 = vpop.xlane.xlu0 %683
    %685 = vadd.xlane.f32.xlu0 %v679
    %v686 = vpop.xlane.xlu0 %685
    %687 = vadd.xlane.f32.xlu0 %v680
    %v688 = vpop.xlane.xlu0 %687
    %v689 = vmax.f32 %v682, 1e-24
    %v690 = vmax.f32 %v684, 1e-24
    %v691 = vmax.f32 %v686, 1e-24
    %v692 = vmax.f32 %v688, 1e-24
    %v693 = vrsqrt.pop %v689
    %v694 = vrsqrt.pop %v690
    %v695 = vrsqrt.pop %v691
    %v696 = vrsqrt.pop %v692
    %v697 = vmul.f32 %v693, 1.0954452
    %v698 = vmul.f32 %v694, 1.0954452
    %v699 = vmul.f32 %v695, 1.0954452
    %v700 = vmul.f32 %v696, 1.0954452
    %v701 = vmul.f32 %v659, %v697
    %v702 = vmul.f32 %v664, %v698
    %v703 = vmul.f32 %v669, %v699
    %v704 = vmul.f32 %v674, %v700
    %v705 = vld [vmem:[#allocation7] sm:$0xff]
    %v706 = vld [vmem:[#allocation7 + $0x8] sm:$0xff]
    %s707 = scalar_lea.vmem [#allocation8], 256
    %v708 = vld [vmem:[%s707] sm:$0xff]
    %v709 = vld [vmem:[%s707 + $0x8] sm:$0xff]
    %v710 = vld [vmem:[%s707 + $0x10] sm:$0xff]
    %v711 = vld [vmem:[%s707 + $0x18] sm:$0xff]
    %v712 = vld [vmem:[%s707 + $0x20] sm:$0xff]
    %v713 = vld [vmem:[%s707 + $0x28] sm:$0xff]
    %v714 = vld [vmem:[%s707 + $0x30] sm:$0xff]
    %v715 = vld [vmem:[%s707 + $0x38] sm:$0xff]
    %v716 = vld [vmem:[%s707 + $0x40] sm:$0xff]
    %v717 = vld [vmem:[%s707 + $0x48] sm:$0xff]
    %v718 = vld [vmem:[%s707 + $0x50] sm:$0xff]
    %v719 = vld [vmem:[%s707 + $0x58] sm:$0xff]
    %v720 = vld [vmem:[%s707 + $0x60] sm:$0xff]
    %v721 = vld [vmem:[%s707 + $0x68] sm:$0xff]
    %v722 = vld [vmem:[%s707 + $0x70] sm:$0xff]
    %v723 = vld [vmem:[%s707 + $0x78] sm:$0xff]
    %s724 = scalar_lea.vmem %s4, 2
    %v725 = vld [vmem:[%s724] sm:$0x1]
    %v727 = vlaneseq
    %v728 = vshrl.u32 %v727, 7
    %v729 = vsub.s32 0, %v728
    %v730 = vrot.slane %v725, %v729
    %732 = vmatprep.subr.mxu0 0.0
    %733 = vmatpush1.msra.mxu0 %v723
    %734 = vmatprep.subr.mxu0 0.0
    %735 = vmatpush1.msra.mxu0 %v722
    %736 = vmatprep.subr.mxu0 0.0
    %737 = vmatpush1.msra.mxu0 %v721
    %738 = vmatprep.subr.mxu0 0.0
    %739 = vmatpush1.msra.mxu0 %v720
    %740 = vmatprep.subr.mxu0 0.0
    %741 = vmatpush1.msra.mxu0 %v719
    %742 = vmatprep.subr.mxu0 0.0
    %743 = vmatpush1.msra.mxu0 %v718
    %744 = vmatprep.subr.mxu0 0.0
    %745 = vmatpush1.msra.mxu0 %v717
    %746 = vmatprep.subr.mxu0 0.0
    %747 = vmatpush1.msra.mxu0 %v716
    %748 = vmatprep.subr.mxu0 0.0
    %749 = vmatpush1.msra.mxu0 %v715
    %750 = vmatprep.subr.mxu0 0.0
    %751 = vmatpush1.msra.mxu0 %v714
    %752 = vmatprep.subr.mxu0 0.0
    %753 = vmatpush1.msra.mxu0 %v713
    %754 = vmatprep.subr.mxu0 0.0
    %755 = vmatpush1.msra.mxu0 %v712
    %756 = vmatprep.subr.mxu0 0.0
    %757 = vmatpush1.msra.mxu0 %v711
    %758 = vmatprep.subr.mxu0 0.0
    %759 = vmatpush1.msra.mxu0 %v710
    %760 = vmatprep.subr.mxu0 0.0
    %761 = vmatpush1.msra.mxu0 %v709
    %762 = vmatprep.subr.mxu0 0.0
    %763 = vmatpush1.msra.mxu0 %v708
    %764 = vmatprep.subr.mxu0 0.0
    %765 = vmatpush2.msra.mxu0 0.0
    %766 = vmatprep.subr.mxu0 0.0
    %767 = vmatpush2.msra.mxu0 0.0
    %768 = vmatprep.subr.mxu0 0.0
    %769 = vmatpush2.msra.mxu0 0.0
    %770 = vmatprep.subr.mxu0 0.0
    %771 = vmatpush2.msra.mxu0 0.0
    %772 = vmatprep.subr.mxu0 0.0
    %773 = vmatpush2.msra.mxu0 0.0
    %774 = vmatprep.subr.mxu0 0.0
    %775 = vmatpush2.msra.mxu0 0.0
    %776 = vmatprep.subr.mxu0 0.0
    %777 = vmatpush2.msra.mxu0 0.0
    %778 = vmatprep.subr.mxu0 0.0
    %779 = vmatpush2.msra.mxu0 0.0
    %780 = vmatprep.subr.mxu0 0.0
    %781 = vmatpush2.msra.mxu0 0.0
    %782 = vmatprep.subr.mxu0 0.0
    %783 = vmatpush2.msra.mxu0 0.0
    %784 = vmatprep.subr.mxu0 0.0
    %785 = vmatpush2.msra.mxu0 0.0
    %786 = vmatprep.subr.mxu0 0.0
    %787 = vmatpush2.msra.mxu0 0.0
    %788 = vmatprep.subr.mxu0 0.0
    %789 = vmatpush2.msra.mxu0 0.0
    %790 = vmatprep.subr.mxu0 0.0
    %791 = vmatpush2.msra.mxu0 0.0
    %792 = vmatprep.subr.mxu0 0.0
    %793 = vmatpush2.msra.mxu0 0.0
    %794 = vmatprep.subr.mxu0 0.0
    %795 = vmatpush2.msra.mxu0 0.0
    %796 = vmatprep.mubr.f32.mxu0 0.0
    %797 = vmatmul.mubr.f32.gmra.mxu0 %v705
    %v798 = vpop.f32.mrf.mxu0
    %v799 = vadd.f32 %v730, %v798
    %v800 = vpop.f32.mrf.mxu0
    %801 = vmatprep.mubr.f32.mxu0 0.0
    %802 = vmatmul.mubr.f32.gmra.mxu0 %v706
    %v803 = vpop.f32.mrf.mxu0
    %v804 = vadd.f32 %v730, %v803
    %v805 = vpop.f32.mrf.mxu0
    %806 = vdwg.mxu0
    %807 = vadd.xlane.f32.xlu0 %v799
    %v808 = vpop.xlane.xlu0 %807
    %809 = vadd.xlane.f32.xlu0 %v804
    %v810 = vpop.xlane.xlu0 %809
    %v811 = vmul.f32 %v799, %v799
    %v812 = vmul.f32 %v804, %v804
    %813 = vadd.xlane.f32.xlu0 %v811
    %v814 = vpop.xlane.xlu0 %813
    %815 = vadd.xlane.f32.xlu0 %v812
    %v816 = vpop.xlane.xlu0 %815
    %v817 = vmul.f32 %v808, 0.0078125
    %v818 = vmul.f32 %v810, 0.0078125
    %v819 = vmul.f32 %v814, 0.0078125
    %v820 = vmul.f32 %v816, 0.0078125
    %v821 = vmul.f32 %v817, %v817
    %v822 = vmul.f32 %v818, %v818
    %v823 = vsub.f32 %v819, %v821
    %v824 = vsub.f32 %v820, %v822
    %v825 = vsub.f32 %v799, %v817
    %v826 = vsub.f32 %v804, %v818
    %v827 = vadd.f32 %v823, 1e-05
    %v828 = vadd.f32 %v824, 1e-05
    %v829 = vrsqrt.pop %v827
    %v830 = vrsqrt.pop %v828
    %v831 = vmul.f32 %v825, %v829
    %v832 = vmul.f32 %v826, %v830
    %s833 = scalar_lea.vmem [#allocation10], 256
    %v834 = vld [vmem:[%s833] sm:$0xff]
    %v835 = vld [vmem:[%s833 + $0x8] sm:$0xff]
    %v836 = vld [vmem:[%s833 + $0x10] sm:$0xff]
    %v837 = vld [vmem:[%s833 + $0x18] sm:$0xff]
    %v838 = vld [vmem:[%s833 + $0x20] sm:$0xff]
    %v839 = vld [vmem:[%s833 + $0x28] sm:$0xff]
    %v840 = vld [vmem:[%s833 + $0x30] sm:$0xff]
    %v841 = vld [vmem:[%s833 + $0x38] sm:$0xff]
    %v842 = vld [vmem:[%s833 + $0x40] sm:$0xff]
    %v843 = vld [vmem:[%s833 + $0x48] sm:$0xff]
    %v844 = vld [vmem:[%s833 + $0x50] sm:$0xff]
    %v845 = vld [vmem:[%s833 + $0x58] sm:$0xff]
    %v846 = vld [vmem:[%s833 + $0x60] sm:$0xff]
    %v847 = vld [vmem:[%s833 + $0x68] sm:$0xff]
    %v848 = vld [vmem:[%s833 + $0x70] sm:$0xff]
    %v849 = vld [vmem:[%s833 + $0x78] sm:$0xff]
    %s850 = scalar_lea.vmem %s6, 2
    %v851 = vld [vmem:[%s850] sm:$0x1]
    %v853 = vlaneseq
    %v854 = vshrl.u32 %v853, 7
    %v855 = vsub.s32 0, %v854
    %v856 = vrot.slane %v851, %v855
    %858 = vmatprep.subr.mxu0 0.0
    %859 = vmatpush1.msra.mxu0 %v849
    %860 = vmatprep.subr.mxu0 0.0
    %861 = vmatpush1.msra.mxu0 %v848
    %862 = vmatprep.subr.mxu0 0.0
    %863 = vmatpush1.msra.mxu0 %v847
    %864 = vmatprep.subr.mxu0 0.0
    %865 = vmatpush1.msra.mxu0 %v846
    %866 = vmatprep.subr.mxu0 0.0
    %867 = vmatpush1.msra.mxu0 %v845
    %868 = vmatprep.subr.mxu0 0.0
    %869 = vmatpush1.msra.mxu0 %v844
    %870 = vmatprep.subr.mxu0 0.0
    %871 = vmatpush1.msra.mxu0 %v843
    %872 = vmatprep.subr.mxu0 0.0
    %873 = vmatpush1.msra.mxu0 %v842
    %874 = vmatprep.subr.mxu0 0.0
    %875 = vmatpush1.msra.mxu0 %v841
    %876 = vmatprep.subr.mxu0 0.0
    %877 = vmatpush1.msra.mxu0 %v840
    %878 = vmatprep.subr.mxu0 0.0
    %879 = vmatpush1.msra.mxu0 %v839
    %880 = vmatprep.subr.mxu0 0.0
    %881 = vmatpush1.msra.mxu0 %v838
    %882 = vmatprep.subr.mxu0 0.0
    %883 = vmatpush1.msra.mxu0 %v837
    %884 = vmatprep.subr.mxu0 0.0
    %885 = vmatpush1.msra.mxu0 %v836
    %886 = vmatprep.subr.mxu0 0.0
    %887 = vmatpush1.msra.mxu0 %v835
    %888 = vmatprep.subr.mxu0 0.0
    %889 = vmatpush1.msra.mxu0 %v834
    %890 = vmatprep.subr.mxu0 0.0
    %891 = vmatpush2.msra.mxu0 0.0
    %892 = vmatprep.subr.mxu0 0.0
    %893 = vmatpush2.msra.mxu0 0.0
    %894 = vmatprep.subr.mxu0 0.0
    %895 = vmatpush2.msra.mxu0 0.0
    %896 = vmatprep.subr.mxu0 0.0
    %897 = vmatpush2.msra.mxu0 0.0
    %898 = vmatprep.subr.mxu0 0.0
    %899 = vmatpush2.msra.mxu0 0.0
    %900 = vmatprep.subr.mxu0 0.0
    %901 = vmatpush2.msra.mxu0 0.0
    %902 = vmatprep.subr.mxu0 0.0
    %903 = vmatpush2.msra.mxu0 0.0
    %904 = vmatprep.subr.mxu0 0.0
    %905 = vmatpush2.msra.mxu0 0.0
    %906 = vmatprep.subr.mxu0 0.0
    %907 = vmatpush2.msra.mxu0 0.0
    %908 = vmatprep.subr.mxu0 0.0
    %909 = vmatpush2.msra.mxu0 0.0
    %910 = vmatprep.subr.mxu0 0.0
    %911 = vmatpush2.msra.mxu0 0.0
    %912 = vmatprep.subr.mxu0 0.0
    %913 = vmatpush2.msra.mxu0 0.0
    %914 = vmatprep.subr.mxu0 0.0
    %915 = vmatpush2.msra.mxu0 0.0
    %916 = vmatprep.subr.mxu0 0.0
    %917 = vmatpush2.msra.mxu0 0.0
    %918 = vmatprep.subr.mxu0 0.0
    %919 = vmatpush2.msra.mxu0 0.0
    %920 = vmatprep.subr.mxu0 0.0
    %921 = vmatpush2.msra.mxu0 0.0
    %922 = vmatprep.mubr.f32.mxu0 0.0
    %923 = vmatmul.mubr.f32.gmra.mxu0 %v831
    %v924 = vpop.f32.mrf.mxu0
    %v925 = vadd.f32 %v856, %v924
    %v926 = vpop.f32.mrf.mxu0
    %927 = vmatprep.mubr.f32.mxu0 0.0
    %928 = vmatmul.mubr.f32.gmra.mxu0 %v832
    %v929 = vpop.f32.mrf.mxu0
    %v930 = vadd.f32 %v856, %v929
    %v931 = vpop.f32.mrf.mxu0
    %932 = vdwg.mxu0
    %v933 = vmul.f32 %v925, %v925
    %v934 = vmul.f32 %v930, %v930
    %935 = vadd.xlane.f32.xlu0 %v933
    %v936 = vpop.xlane.xlu0 %935
    %937 = vadd.xlane.f32.xlu0 %v934
    %v938 = vpop.xlane.xlu0 %937
    %v939 = vmax.f32 %v936, 1e-24
    %v940 = vmax.f32 %v938, 1e-24
    %v941 = vrsqrt.pop %v939
    %v942 = vrsqrt.pop %v940
    %v943 = vmul.f32 %v941, 1.0954452
    %v944 = vmul.f32 %v942, 1.0954452
    %v945 = vmul.f32 %v925, %v943
    %v946 = vmul.f32 %v930, %v944
    %947 = vst [vmem:[#allocation11] sm:$0xff] %v355
    %948 = vst [vmem:[#allocation11 + $0x8] sm:$0xff] %v360
    %949 = vst [vmem:[#allocation11 + $0x10] sm:$0xff] %v365
    %950 = vst [vmem:[#allocation11 + $0x18] sm:$0xff] %v370
    %951 = vst [vmem:[#allocation12] sm:$0xff] %v659
    %952 = vst [vmem:[#allocation12 + $0x8] sm:$0xff] %v664
    %953 = vst [vmem:[#allocation12 + $0x10] sm:$0xff] %v669
    %954 = vst [vmem:[#allocation12 + $0x18] sm:$0xff] %v674
    %955 = vst [vmem:[#allocation14] sm:$0xff] %v925
    %956 = vst [vmem:[#allocation14 + $0x8] sm:$0xff] %v930
    %957 = vmatprep.subr.mxu0 0.0
    %958 = vmatpush1.xpose.msra.mxu0 0.0
    %959 = vmatprep.subr.mxu0 0.0
    %960 = vmatpush1.xpose.msra.mxu0 0.0
    %961 = vmatprep.subr.mxu0 0.0
    %962 = vmatpush1.xpose.msra.mxu0 0.0
    %963 = vmatprep.subr.mxu0 0.0
    %964 = vmatpush1.xpose.msra.mxu0 0.0
    %965 = vmatprep.subr.mxu0 0.0
    %966 = vmatpush1.xpose.msra.mxu0 0.0
    %967 = vmatprep.subr.mxu0 0.0
    %968 = vmatpush1.xpose.msra.mxu0 0.0
    %969 = vmatprep.subr.mxu0 0.0
    %970 = vmatpush1.xpose.msra.mxu0 0.0
    %971 = vmatprep.subr.mxu0 0.0
    %972 = vmatpush1.xpose.msra.mxu0 0.0
    %973 = vmatprep.subr.mxu0 0.0
    %974 = vmatpush1.xpose.msra.mxu0 %v704
    %975 = vmatprep.subr.mxu0 0.0
    %976 = vmatpush1.xpose.msra.mxu0 %v703
    %977 = vmatprep.subr.mxu0 0.0
    %978 = vmatpush1.xpose.msra.mxu0 %v702
    %979 = vmatprep.subr.mxu0 0.0
    %980 = vmatpush1.xpose.msra.mxu0 %v701
    %981 = vmatprep.subr.mxu0 0.0
    %982 = vmatpush1.xpose.msra.mxu0 %v400
    %983 = vmatprep.subr.mxu0 0.0
    %984 = vmatpush1.xpose.msra.mxu0 %v399
    %985 = vmatprep.subr.mxu0 0.0
    %986 = vmatpush1.xpose.msra.mxu0 %v398
    %987 = vmatprep.subr.mxu0 0.0
    %988 = vmatpush1.xpose.msra.mxu0 %v397
    %989 = vmatprep.subr.mxu0 0.0
    %990 = vmatpush2.xpose.msra.mxu0 0.0
    %991 = vmatprep.subr.mxu0 0.0
    %992 = vmatpush2.xpose.msra.mxu0 0.0
    %993 = vmatprep.subr.mxu0 0.0
    %994 = vmatpush2.xpose.msra.mxu0 0.0
    %995 = vmatprep.subr.mxu0 0.0
    %996 = vmatpush2.xpose.msra.mxu0 0.0
    %997 = vmatprep.subr.mxu0 0.0
    %998 = vmatpush2.xpose.msra.mxu0 0.0
    %999 = vmatprep.subr.mxu0 0.0
    %1000 = vmatpush2.xpose.msra.mxu0 0.0
    %1001 = vmatprep.subr.mxu0 0.0
    %1002 = vmatpush2.xpose.msra.mxu0 0.0
    %1003 = vmatprep.subr.mxu0 0.0
    %1004 = vmatpush2.xpose.msra.mxu0 0.0
    %1005 = vmatprep.subr.mxu0 0.0
    %1006 = vmatpush2.xpose.msra.mxu0 0.0
    %1007 = vmatprep.subr.mxu0 0.0
    %1008 = vmatpush2.xpose.msra.mxu0 0.0
    %1009 = vmatprep.subr.mxu0 0.0
    %1010 = vmatpush2.xpose.msra.mxu0 0.0
    %1011 = vmatprep.subr.mxu0 0.0
    %1012 = vmatpush2.xpose.msra.mxu0 0.0
    %1013 = vmatprep.subr.mxu0 0.0
    %1014 = vmatpush2.xpose.msra.mxu0 0.0
    %1015 = vmatprep.subr.mxu0 0.0
    %1016 = vmatpush2.xpose.msra.mxu0 0.0
    %1017 = vmatprep.subr.mxu0 0.0
    %1018 = vmatpush2.xpose.msra.mxu0 0.0
    %1019 = vmatprep.subr.mxu0 0.0
    %1020 = vmatpush2.xpose.msra.mxu0 0.0
    %1021 = vmatprep.mubr.f32.mxu0 0.0
    %1022 = vmatmul.mubr.f32.gmra.mxu0 %v945
    %v1023 = vpop.f32.mrf.mxu0
    %v1024 = vadd.f32 0.0, %v1023
    %v1025 = vpop.f32.mrf.mxu0
    %1026 = vmatprep.mubr.f32.mxu0 0.0
    %1027 = vmatmul.mubr.f32.gmra.mxu0 %v946
    %v1028 = vpop.f32.mrf.mxu0
    %v1029 = vadd.f32 0.0, %v1028
    %v1030 = vpop.f32.mrf.mxu0
    %1031 = vmatprep.mubr.f32.mxu0 0.0
    %1032 = vmatmul.mubr.f32.gmra.mxu0 %v701
    %v1033 = vpop.f32.mrf.mxu0
    %v1034 = vadd.f32 0.0, %v1033
    %v1035 = vpop.f32.mrf.mxu0
    %1036 = vmatprep.mubr.f32.mxu0 0.0
    %1037 = vmatmul.mubr.f32.gmra.mxu0 %v702
    %v1038 = vpop.f32.mrf.mxu0
    %v1039 = vadd.f32 0.0, %v1038
    %v1040 = vpop.f32.mrf.mxu0
    %1041 = vmatprep.mubr.f32.mxu0 0.0
    %1042 = vmatmul.mubr.f32.gmra.mxu0 %v703
    %v1043 = vpop.f32.mrf.mxu0
    %v1044 = vadd.f32 0.0, %v1043
    %v1045 = vpop.f32.mrf.mxu0
    %1046 = vmatprep.mubr.f32.mxu0 0.0
    %1047 = vmatmul.mubr.f32.gmra.mxu0 %v704
    %v1048 = vpop.f32.mrf.mxu0
    %v1049 = vadd.f32 0.0, %v1048
    %v1050 = vpop.f32.mrf.mxu0
    %1051 = vdwg.mxu0
    %1052 = vst [vmem:[#allocation15] sm:$0xff] %v1024
    %1053 = vst [vmem:[#allocation15 + $0x8] sm:$0xff] %v1029
    %1054 = vst [vmem:[#allocation15 + $0x10] sm:$0xff] %v1034
    %1055 = vst [vmem:[#allocation15 + $0x18] sm:$0xff] %v1039
    %1056 = vst [vmem:[#allocation15 + $0x20] sm:$0xff] %v1044
    %1057 = vst [vmem:[#allocation15 + $0x28] sm:$0xff] %v1049
    // Predicated region
    $region50: #{tpu_custom_call.1} parent=1 // pred_check
      _
    $region51: #{tpu_custom_call.1} parent=1 // pred_check_branch
      %1059 = sbr.rel (0) target = $region53
    $region52: #{tpu_custom_call.1} parent=1 // pred_region
      %s1061 = ssub.s32 512, 512
      %1062 = vsyncadd [#allocation4], %s1061
      %s1063 = sshll.u32 [#allocation11], 4
      %s1064 = int_to_ptr.vmem [resolvable:$true] %s1063
      %1069 = dma.vmem_to_hbm [thread:$0]  %s1064, 512, %s7, [#allocation4], 128, 128, 8
    $region53: #{tpu_custom_call.1} parent=1 // pred_fallthru
      _
    // Predicated region
    $region54: #{tpu_custom_call.1} parent=1 // pred_check
      _
    $region55: #{tpu_custom_call.1} parent=1 // pred_check_branch
      %1071 = sbr.rel (0) target = $region57
    $region56: #{tpu_custom_call.1} parent=1 // pred_region
      %s1073 = ssub.s32 512, 512
      %1074 = vsyncadd [#allocation13], %s1073
      %s1075 = sshll.u32 [#allocation12], 4
      %s1076 = int_to_ptr.vmem [resolvable:$true] %s1075
      %1081 = dma.vmem_to_hbm [thread:$0]  %s1076, 512, %s8, [#allocation13], 128, 128, 8
    $region57: #{tpu_custom_call.1} parent=1 // pred_fallthru
      _
    // Predicated region
    $region58: #{tpu_custom_call.1} parent=1 // pred_check
      _
    $region59: #{tpu_custom_call.1} parent=1 // pred_check_branch
      %1083 = sbr.rel (0) target = $region61
    $region60: #{tpu_custom_call.1} parent=1 // pred_region
      %s1085 = ssub.s32 256, 256
      %1086 = vsyncadd [#allocation13], %s1085
      %s1087 = sshll.u32 [#allocation14], 4
      %s1088 = int_to_ptr.vmem [resolvable:$true] %s1087
      %1093 = dma.vmem_to_hbm [thread:$0]  %s1088, 256, %s9, [#allocation13], 128, 128, 8
    $region61: #{tpu_custom_call.1} parent=1 // pred_fallthru
      _
    // Predicated region
    $region62: #{tpu_custom_call.1} parent=1 // pred_check
      _
    $region63: #{tpu_custom_call.1} parent=1 // pred_check_branch
      %1095 = sbr.rel (0) target = $region65
    $region64: #{tpu_custom_call.1} parent=1 // pred_region
      %s1097 = ssub.s32 768, 768
      %1098 = vsyncadd [#allocation16], %s1097
      %s1099 = sshll.u32 [#allocation15], 4
      %s1100 = int_to_ptr.vmem [resolvable:$true] %s1099
      %1105 = dma.vmem_to_hbm [thread:$0]  %s1100, 768, %s10, [#allocation16], 128, 128, 8
    $region65: #{tpu_custom_call.1} parent=1 // pred_fallthru
      _
    // Predicated region
    $region66: #{tpu_custom_call.1} parent=1 // pred_check
      _
    $region67: #{tpu_custom_call.1} parent=1 // pred_check_branch
      %1107 = sbr.rel (0) target = $region69
    $region68: #{tpu_custom_call.1} parent=1 // pred_region
      %1108 = dma.done [#allocation4], 512
    $region69: #{tpu_custom_call.1} parent=1 // pred_fallthru
      _
    // Predicated region
    $region70: #{tpu_custom_call.1} parent=1 // pred_check
      _
    $region71: #{tpu_custom_call.1} parent=1 // pred_check_branch
      %1110 = sbr.rel (0) target = $region73
    $region72: #{tpu_custom_call.1} parent=1 // pred_region
      %1111 = dma.done [#allocation13], 512
    $region73: #{tpu_custom_call.1} parent=1 // pred_fallthru
      _
    // Predicated region
    $region74: #{tpu_custom_call.1} parent=1 // pred_check
      _
    $region75: #{tpu_custom_call.1} parent=1 // pred_check_branch
      %1113 = sbr.rel (0) target = $region77
    $region76: #{tpu_custom_call.1} parent=1 // pred_region
      %1114 = dma.done [#allocation13], 256
    $region77: #{tpu_custom_call.1} parent=1 // pred_fallthru
      _
    // Predicated region
    $region78: #{tpu_custom_call.1} parent=1 // pred_check
      _
    $region79: #{tpu_custom_call.1} parent=1 // pred_check_branch
      %1116 = sbr.rel (0) target = $region81
    $region80: #{tpu_custom_call.1} parent=1 // pred_region
      %1117 = dma.done [#allocation16], 768
    $region81: #{tpu_custom_call.1} parent=1 // pred_fallthru
      _
    %1118 = vsyncpa [#allocation3], 1
    %1119 = vsyncpa [#allocation6], 1
    %1120 = vsyncpa [#allocation9], 1
    %1121 = vsyncpa [#allocation4], 1
    %1122 = vsyncpa [#allocation13], 1
    %1123 = vsyncpa [#allocation16], 1

</llo_original>
